<compile_context>
chip_gen: v7x
topology: tpu7x:2x2x1
jax: 0.10.0
libtpu: 0.0.40
codegen_flags: <defaults>
</compile_context>

<pallas_src>
import functools
import numpy as np
import jax
import jax.numpy as jnp
from jax.experimental import pallas as pl
from jax.experimental.pallas import tpu as pltpu


def _leaky_relu(v, slope=0.2):
    return jnp.where(v > 0, v, slope * v)


def _latent_kernel(x_ref, w12_ref, b12_ref, w3_ref, b3_ref, noise_ref,
                   out_ref, mu_ref, logvar_ref):
    """Fused encode -> reparametrize -> decode.

    x_ref:     (B, flat_in)            f32  (cast to bf16 in-kernel, VPU-free)
    w12_ref:   (flat_in, 2*latent)     bf16 (fc1 | fc2 concatenated on N)
    b12_ref:   (1, 2*latent)           f32
    w3_ref:    (latent, flat_out)      bf16
    b3_ref:    (1, flat_out)           f32
    noise_ref: (B, latent)             f32
    out_ref:   (B, flat_out)           f32
    mu_ref, logvar_ref: (B, latent)    f32
    """
    latent = mu_ref.shape[-1]

    # --- encode: single fused matmul, f32 accumulation, f32 elementwise ---
    xb = x_ref[...].astype(jnp.bfloat16)
    enc = jnp.dot(xb, w12_ref[...],
                  preferred_element_type=jnp.float32)          # (B, 2*latent) f32
    enc = _leaky_relu(enc + b12_ref[...])
    mu = enc[:, :latent]          # lane-aligned slice (latent % 128 == 0)
    logvar = enc[:, latent:]

    # --- reparametrize: z = noise * exp(0.5 * logvar) + mu (f32) ---
    z = noise_ref[...] * jnp.exp(logvar * 0.5) + mu

    # --- decode ---
    dec = jnp.dot(z.astype(w3_ref.dtype), w3_ref[...],
                  preferred_element_type=jnp.float32)          # (B, flat_out) f32
    out_ref[...] = _leaky_relu(dec + b3_ref[...])

    mu_ref[...] = mu
    logvar_ref[...] = logvar


@functools.partial(jax.jit, static_argnames=("output_shape",))
def _forward_jit(x, w12, b12, w3, b3, noise, output_shape):
    B = x.shape[0]
    flat_in = int(np.prod(x.shape[1:]))
    flat_out = int(np.prod(output_shape))
    latent_dim = w12.shape[1] // 2

    # Reshape is a free view; x stays f32 and is cast in-kernel.
    x_flat = x.reshape(B, flat_in)

    # Grid-less call, every operand fully VMEM-resident (single-buffered).
    vmem = pl.BlockSpec(memory_space=pltpu.MemorySpace.VMEM)

    flops = 2 * B * (flat_in * 2 * latent_dim + latent_dim * flat_out)
    bytes_accessed = (x_flat.size * 4                      # f32 activations in
                      + w12.size * 2 + w3.size * 2         # bf16 weights
                      + b12.size * 4 + b3.size * 4         # f32 biases
                      + noise.size * 4                     # f32 noise
                      + (B * flat_out + 2 * B * latent_dim) * 4)  # f32 outputs
    cost = pl.CostEstimate(flops=flops,
                           transcendentals=B * latent_dim,
                           bytes_accessed=bytes_accessed)

    out, mu, logvar = pl.pallas_call(
        _latent_kernel,
        in_specs=[vmem] * 6,
        out_specs=[vmem] * 3,
        out_shape=[
            jax.ShapeDtypeStruct((B, flat_out), jnp.float32),
            jax.ShapeDtypeStruct((B, latent_dim), jnp.float32),
            jax.ShapeDtypeStruct((B, latent_dim), jnp.float32),
        ],
        cost_estimate=cost,
    )(x_flat, w12, b12, w3, b3, noise)

    decoded = out.reshape(B, *output_shape)
    return decoded, mu, logvar


def stochastic_linear_latent_forward(x, params, noise, output_shape):
    """x: (B, *input_shape) NCHW; params as produced by init_params (bf16
    weights, f32 biases); noise: (B, latent_dim) f32.  Returns
    [decoded, mu, logvar]."""
    latent_dim = params["w12"].shape[1] // 2
    flat_out = int(np.prod(output_shape))
    # Explicit lane-alignment contract: keeps the fused-encoder column split and
    # the output stores lane-dense (no XLU relayout, no masked partial stores).
    if latent_dim % 128 != 0 or flat_out % 128 != 0:
        raise ValueError(
            f"latent_dim ({latent_dim}) and flat_out ({flat_out}) must be "
            "multiples of 128 for this kernel.")
    if params["w12"].dtype != jnp.bfloat16 or params["w3"].dtype != jnp.bfloat16:
        raise ValueError("weights must be pre-cast to bfloat16 at load time "
                         "(see init_params); per-call casts defeat the point.")

    decoded, mu, logvar = _forward_jit(
        x, params["w12"], params["b12"], params["w3"], params["b3"],
        noise.astype(jnp.float32), output_shape)
    return [decoded, mu, logvar]


def init_params(key, flat_in, latent_dim, flat_out):
    """PyTorch-style uniform(+-1/sqrt(fan_in)) init.  fc1/fc2 are concatenated
    along the output dim into w12/b12; weights are stored (in, out) so the
    kernel computes x @ W + b, and cast to bfloat16 ONCE here (load time) so no
    convert kernels run per forward call."""
    k1, k2, k3, k4, k5, k6 = jax.random.split(key, 6)
    lim1 = 1.0 / np.sqrt(flat_in)
    lim3 = 1.0 / np.sqrt(latent_dim)
    w1 = jax.random.uniform(k1, (flat_in, latent_dim), jnp.float32, -lim1, lim1)
    b1 = jax.random.uniform(k2, (1, latent_dim), jnp.float32, -lim1, lim1)
    w2 = jax.random.uniform(k3, (flat_in, latent_dim), jnp.float32, -lim1, lim1)
    b2 = jax.random.uniform(k4, (1, latent_dim), jnp.float32, -lim1, lim1)
    w3 = jax.random.uniform(k5, (latent_dim, flat_out), jnp.float32, -lim3, lim3)
    b3 = jax.random.uniform(k6, (1, flat_out), jnp.float32, -lim3, lim3)
    return {
        "w12": jnp.concatenate([w1, w2], axis=1).astype(jnp.bfloat16),
        "b12": jnp.concatenate([b1, b2], axis=1),           # (1, 2*latent) f32
        "w3": w3.astype(jnp.bfloat16),                       # (latent, flat_out)
        "b3": b3,                                             # (1, flat_out) f32
    }


if __name__ == "__main__":
    # Small shapes consistent with the module: NCHW input, modest latent_dim.
    B = 2
    input_shape = (4, 16, 16)     # flat_in  = 1024
    output_shape = (4, 8, 8)      # flat_out = 256
    latent_dim = 256

    flat_in = int(np.prod(input_shape))
    flat_out = int(np.prod(output_shape))

    key = jax.random.PRNGKey(0)
    kx, kp, kn = jax.random.split(key, 3)

    x = jax.random.normal(kx, (B, *input_shape), jnp.float32)
    params = init_params(kp, flat_in, latent_dim, flat_out)
    # torch.randn(len(mu), latent_dim) equivalent; the stochastic draw is glue,
    # the reparametrization arithmetic runs inside the kernel.
    noise = jax.random.normal(kn, (B, latent_dim), jnp.float32)

    decoded, mu, logvar = stochastic_linear_latent_forward(
        x, params, noise, output_shape)
    jax.block_until_ready((decoded, mu, logvar))

    # Pure-JAX reference with the same bf16 operand casts / f32 accumulation.
    lr = lambda v: jnp.where(v > 0, v, 0.2 * v)
    xb = x.reshape(B, flat_in).astype(jnp.bfloat16)
    enc_ref = lr(jnp.dot(xb, params["w12"],
                         preferred_element_type=jnp.float32) + params["b12"])
    mu_ref = enc_ref[:, :latent_dim]
    lv_ref = enc_ref[:, latent_dim:]
    z_ref = noise * jnp.exp(0.5 * lv_ref) + mu_ref
    dec_ref = lr(jnp.dot(z_ref.astype(jnp.bfloat16), params["w3"],
                         preferred_element_type=jnp.float32)
                 + params["b3"]).reshape(B, *output_shape)

    assert decoded.shape == (B, *output_shape)
    assert mu.shape == (B, latent_dim) and logvar.shape == (B, latent_dim)
    np.testing.assert_allclose(np.asarray(mu), np.asarray(mu_ref), rtol=1e-2, atol=1e-2)
    np.testing.assert_allclose(np.asarray(logvar), np.asarray(lv_ref), rtol=1e-2, atol=1e-2)
    np.testing.assert_allclose(np.asarray(decoded), np.asarray(dec_ref), rtol=1e-2, atol=1e-2)

    print("KERNEL_OK")
</pallas_src>

<mosaic_0001>
module attributes {stable_mosaic.version = 11 : i64} {
  func.func @_latent_kernel(%arg0: memref<2x1024xf32, #tpu.memory_space<vmem>>, %arg1: memref<1024x512xbf16, #tpu.memory_space<vmem>>, %arg2: memref<1x512xf32, #tpu.memory_space<vmem>>, %arg3: memref<256x256xbf16, #tpu.memory_space<vmem>>, %arg4: memref<1x256xf32, #tpu.memory_space<vmem>>, %arg5: memref<2x256xf32, #tpu.memory_space<vmem>>, %arg6: memref<2x256xf32, #tpu.memory_space<vmem>>, %arg7: memref<2x256xf32, #tpu.memory_space<vmem>>, %arg8: memref<2x256xf32, #tpu.memory_space<vmem>>) attributes {dimension_semantics = [], scalar_prefetch = 0 : i64, scratch_operands = 0 : i64, tpu.core_type = #tpu.core_type<tc>} {
    %c0 = arith.constant 0 : index
    %c0_0 = arith.constant 0 : index
    %0 = vector.load %arg0[%c0, %c0_0] : memref<2x1024xf32, #tpu.memory_space<vmem>>, vector<2x1024xf32>
    %1 = arith.truncf %0 : vector<2x1024xf32> to vector<2x1024xbf16>
    %c0_1 = arith.constant 0 : index
    %c0_2 = arith.constant 0 : index
    %2 = vector.load %arg1[%c0_1, %c0_2] : memref<1024x512xbf16, #tpu.memory_space<vmem>>, vector<1024x512xbf16>
    %cst = arith.constant dense<0.000000e+00> : vector<2x512xf32>
    %3 = tpu.matmul %1, %2, %cst {dimension_numbers = #tpu.dot_dimension_numbers<[1], [0], [0], [1], [0, 0, 1, 1], [], []>} : vector<2x1024xbf16>, vector<1024x512xbf16>, vector<2x512xf32> -> vector<2x512xf32>
    %c0_3 = arith.constant 0 : index
    %c0_4 = arith.constant 0 : index
    %4 = vector.load %arg2[%c0_3, %c0_4] : memref<1x512xf32, #tpu.memory_space<vmem>>, vector<1x512xf32>
    %5 = vector.broadcast %4 : vector<1x512xf32> to vector<2x512xf32>
    %6 = arith.addf %3, %5 : vector<2x512xf32>
    %cst_5 = arith.constant 0.000000e+00 : f32
    %7 = vector.broadcast %cst_5 : f32 to vector<2x512xf32>
    %8 = arith.cmpf ogt, %6, %7 : vector<2x512xf32>
    %cst_6 = arith.constant 2.000000e-01 : f32
    %9 = vector.broadcast %cst_6 : f32 to vector<2x512xf32>
    %10 = arith.mulf %9, %6 : vector<2x512xf32>
    %11 = arith.select %8, %6, %10 : vector<2x512xi1>, vector<2x512xf32>
    %12 = vector.extract_strided_slice %11 {offsets = [0, 0], sizes = [2, 256], strides = [1, 1]} : vector<2x512xf32> to vector<2x256xf32>
    %13 = vector.extract_strided_slice %11 {offsets = [0, 256], sizes = [2, 256], strides = [1, 1]} : vector<2x512xf32> to vector<2x256xf32>
    %c0_7 = arith.constant 0 : index
    %c0_8 = arith.constant 0 : index
    %14 = vector.load %arg5[%c0_7, %c0_8] : memref<2x256xf32, #tpu.memory_space<vmem>>, vector<2x256xf32>
    %cst_9 = arith.constant 5.000000e-01 : f32
    %15 = vector.broadcast %cst_9 : f32 to vector<2x256xf32>
    %16 = arith.mulf %13, %15 : vector<2x256xf32>
    %17 = math.exp %16 : vector<2x256xf32>
    %18 = arith.mulf %14, %17 : vector<2x256xf32>
    %19 = arith.addf %18, %12 : vector<2x256xf32>
    %20 = arith.truncf %19 : vector<2x256xf32> to vector<2x256xbf16>
    %c0_10 = arith.constant 0 : index
    %c0_11 = arith.constant 0 : index
    %21 = vector.load %arg3[%c0_10, %c0_11] : memref<256x256xbf16, #tpu.memory_space<vmem>>, vector<256x256xbf16>
    %cst_12 = arith.constant dense<0.000000e+00> : vector<2x256xf32>
    %22 = tpu.matmul %20, %21, %cst_12 {dimension_numbers = #tpu.dot_dimension_numbers<[1], [0], [0], [1], [0, 0, 1, 1], [], []>} : vector<2x256xbf16>, vector<256x256xbf16>, vector<2x256xf32> -> vector<2x256xf32>
    %c0_13 = arith.constant 0 : index
    %c0_14 = arith.constant 0 : index
    %23 = vector.load %arg4[%c0_13, %c0_14] : memref<1x256xf32, #tpu.memory_space<vmem>>, vector<1x256xf32>
    %24 = vector.broadcast %23 : vector<1x256xf32> to vector<2x256xf32>
    %25 = arith.addf %22, %24 : vector<2x256xf32>
    %cst_15 = arith.constant 0.000000e+00 : f32
    %26 = vector.broadcast %cst_15 : f32 to vector<2x256xf32>
    %27 = arith.cmpf ogt, %25, %26 : vector<2x256xf32>
    %cst_16 = arith.constant 2.000000e-01 : f32
    %28 = vector.broadcast %cst_16 : f32 to vector<2x256xf32>
    %29 = arith.mulf %28, %25 : vector<2x256xf32>
    %30 = arith.select %27, %25, %29 : vector<2x256xi1>, vector<2x256xf32>
    %c0_17 = arith.constant 0 : index
    %c0_18 = arith.constant 0 : index
    %31 = vector.load %arg6[%c0_17, %c0_18] : memref<2x256xf32, #tpu.memory_space<vmem>>, vector<2x256xf32>
    tpu.vector_store %arg6[%c0_17, %c0_18], %30 {strides = array<i32>} : memref<2x256xf32, #tpu.memory_space<vmem>>, vector<2x256xf32>,
    %c0_19 = arith.constant 0 : index
    %c0_20 = arith.constant 0 : index
    %32 = vector.load %arg7[%c0_19, %c0_20] : memref<2x256xf32, #tpu.memory_space<vmem>>, vector<2x256xf32>
    tpu.vector_store %arg7[%c0_19, %c0_20], %12 {strides = array<i32>} : memref<2x256xf32, #tpu.memory_space<vmem>>, vector<2x256xf32>,
    %c0_21 = arith.constant 0 : index
    %c0_22 = arith.constant 0 : index
    %33 = vector.load %arg8[%c0_21, %c0_22] : memref<2x256xf32, #tpu.memory_space<vmem>>, vector<2x256xf32>
    tpu.vector_store %arg8[%c0_21, %c0_22], %13 {strides = array<i32>} : memref<2x256xf32, #tpu.memory_space<vmem>>, vector<2x256xf32>,
    return
  }
}

</mosaic_0001>

<llo_original>
// kernel: _forward_jit.1
$region0: #{_forward_jit.1}
  #allocation0 [shape = 'u32[]', space=smem, size = 0x4, offset = 0x4, fixed_abs, tag = 'smem constant byte address 0x4 - core index']
  #allocation1 [shape = 'u32[144,128]{1,0:T(1,128)}', space=vmem, size = 0x12000, scoped, tag = 'internal scratch']
  %s0 = inlined_call_operand.vmem [shape: f32[2,1024], index: 0, kind: input, shape index: {}]
  %s1 = inlined_call_operand.hbm [shape: bf16[1024,512], index: 1, kind: input, shape index: {}]
  %s2 = inlined_call_operand.vmem [shape: f32[1,512], index: 2, kind: input, shape index: {}]
  %s3 = inlined_call_operand.hbm [shape: bf16[256,256], index: 3, kind: input, shape index: {}]
  %s4 = inlined_call_operand.vmem [shape: f32[1,256], index: 4, kind: input, shape index: {}]
  %s5 = inlined_call_operand.vmem [shape: f32[2,256], index: 5, kind: input, shape index: {}]
  %s6 = inlined_call_operand.vmem [shape: f32[2,256], index: 6, kind: output, shape index: {0}]
  %s7 = inlined_call_operand.hbm [shape: f32[2,256], index: 7, kind: output, shape index: {1}]
  %s8 = inlined_call_operand.hbm [shape: f32[2,256], index: 8, kind: output, shape index: {2}]
  %9 = xla_tuple %s6, %s7, %s8
  %s10 = sld [smem:[#allocation0]]
  $region58: #{_forward_jit.1} parent=0
    _
  %s12 = ssub.s32 1, %s10
  %s13 = scalar_select 0, %s12, %s10
  $region1: #{_forward_jit.1} parent=0
    #allocation2 [shape = 'u8[1048576]{0}', space=vmem, size = 0x100000, scoped, tag = 'input window, operand 1, single buffered']
    #allocation3 [shape = 's32[1]{0}', space=sflag, size = 0x4, scoped, tag = 'scoped memory for _forward_jit.1']
    #allocation4 [shape = 's32[1]{0}', space=sflag, size = 0x4, scoped, tag = 'scoped memory for _forward_jit.1']
    #allocation5 [shape = 'u8[131072]{0}', space=vmem, size = 0x20000, scoped, tag = 'input window, operand 3, single buffered']
    #allocation6 [shape = 's32[1]{0}', space=sflag, size = 0x4, scoped, tag = 'scoped memory for _forward_jit.1']
    #allocation7 [shape = 'u8[2048]{0}', space=vmem, size = 0x800, scoped, tag = 'output window, operand 1, single buffered']
    #allocation8 [shape = 'u8[2048]{0}', space=vmem, size = 0x800, scoped, tag = 'output window, operand 2, single buffered']
    #allocation9 [shape = 's32[1]{0}', space=sflag, size = 0x4, scoped, tag = 'scoped memory for _forward_jit.1']
    %14 = vsyncpa [#allocation3], 0
    %15 = vsyncpa [#allocation6], 0
    %16 = vsyncpa [#allocation4], 0
    %17 = vsyncpa [#allocation9], 0
    // Predicated region
    $region2: #{_forward_jit.1} parent=1 // pred_check
      _
    $region3: #{_forward_jit.1} parent=1 // pred_check_branch
      %19 = sbr.rel (0) target = $region5
    $region4: #{_forward_jit.1} parent=1 // pred_region
      _
    $region5: #{_forward_jit.1} parent=1 // pred_fallthru
      _
    // Predicated region
    $region6: #{_forward_jit.1} parent=1 // pred_check
      _
    $region7: #{_forward_jit.1} parent=1 // pred_check_branch
      %21 = sbr.rel (0) target = $region9
    $region8: #{_forward_jit.1} parent=1 // pred_region
      %s23 = ssub.s32 32768, 32768
      %24 = vsyncadd [#allocation3], %s23
      %s25 = sshll.u32 [#allocation2], 4
      %s26 = int_to_ptr.vmem [resolvable:$true] %s25
      %31 = dma.hbm_to_vmem [thread:$0]  %s1, 32768, %s26, [#allocation3], 256, 256, 16
    $region9: #{_forward_jit.1} parent=1 // pred_fallthru
      _
    // Predicated region
    $region10: #{_forward_jit.1} parent=1 // pred_check
      _
    $region11: #{_forward_jit.1} parent=1 // pred_check_branch
      %33 = sbr.rel (0) target = $region13
    $region12: #{_forward_jit.1} parent=1 // pred_region
      _
    $region13: #{_forward_jit.1} parent=1 // pred_fallthru
      _
    // Predicated region
    $region14: #{_forward_jit.1} parent=1 // pred_check
      _
    $region15: #{_forward_jit.1} parent=1 // pred_check_branch
      %35 = sbr.rel (0) target = $region17
    $region16: #{_forward_jit.1} parent=1 // pred_region
      %s37 = ssub.s32 4096, 4096
      %38 = vsyncadd [#allocation6], %s37
      %s39 = sshll.u32 [#allocation5], 4
      %s40 = int_to_ptr.vmem [resolvable:$true] %s39
      %45 = dma.hbm_to_vmem [thread:$0]  %s3, 4096, %s40, [#allocation6], 128, 128, 8
    $region17: #{_forward_jit.1} parent=1 // pred_fallthru
      _
    // Predicated region
    $region18: #{_forward_jit.1} parent=1 // pred_check
      _
    $region19: #{_forward_jit.1} parent=1 // pred_check_branch
      %47 = sbr.rel (0) target = $region21
    $region20: #{_forward_jit.1} parent=1 // pred_region
      _
    $region21: #{_forward_jit.1} parent=1 // pred_fallthru
      _
    // Predicated region
    $region22: #{_forward_jit.1} parent=1 // pred_check
      _
    $region23: #{_forward_jit.1} parent=1 // pred_check_branch
      %49 = sbr.rel (0) target = $region25
    $region24: #{_forward_jit.1} parent=1 // pred_region
      _
    $region25: #{_forward_jit.1} parent=1 // pred_fallthru
      _
    // Predicated region
    $region26: #{_forward_jit.1} parent=1 // pred_check
      _
    $region27: #{_forward_jit.1} parent=1 // pred_check_branch
      %51 = sbr.rel (0) target = $region29
    $region28: #{_forward_jit.1} parent=1 // pred_region
      %52 = dma.done [#allocation3], 32768
    $region29: #{_forward_jit.1} parent=1 // pred_fallthru
      _
    // Predicated region
    $region30: #{_forward_jit.1} parent=1 // pred_check
      _
    $region31: #{_forward_jit.1} parent=1 // pred_check_branch
      %54 = sbr.rel (0) target = $region33
    $region32: #{_forward_jit.1} parent=1 // pred_region
      %55 = dma.done [#allocation6], 4096
    $region33: #{_forward_jit.1} parent=1 // pred_fallthru
      _
    %v56 = vld [vmem:[%s0] sm:$0xff]
    %v57 = vld [vmem:[%s0 + $0x8] sm:$0xff]
    %v60 = vcombine.high %v56, %v56
    %v62 = vunpack.c.l.s4 1983009808
    %v63 = vunpack.c.0.s8 %v62
    %v64 = vlaneseq
    %v65 = vshrl.u32 %v64, 7
    %v66 = vsub.s32 %v63, %v65
    %v67 = vrot.slane %v56, %v66
    %v69 = vunpack.c.l.s4 1983009808
    %v70 = vunpack.c.0.s8 %v69
    %v71 = vlaneseq
    %v72 = vshrl.u32 %v71, 7
    %v73 = vsub.s32 %v70, %v72
    %v74 = vrot.slane %v60, %v73
    %v75 = vcombine.high %v67, %v67
    %v76 = vcombine.high %v74, %v74
    %v77 = vcombine.high %v57, %v57
    %v79 = vunpack.c.l.s4 1983009808
    %v80 = vunpack.c.0.s8 %v79
    %v81 = vlaneseq
    %v82 = vshrl.u32 %v81, 7
    %v83 = vsub.s32 %v80, %v82
    %v84 = vrot.slane %v57, %v83
    %v86 = vunpack.c.l.s4 1983009808
    %v87 = vunpack.c.0.s8 %v86
    %v88 = vlaneseq
    %v89 = vshrl.u32 %v88, 7
    %v90 = vsub.s32 %v87, %v89
    %v91 = vrot.slane %v77, %v90
    %v92 = vcombine.high %v84, %v84
    %v93 = vcombine.high %v91, %v91
    %v102 = vpack.c.bf16 %v67, %v67
    %v103 = vpack.c.bf16 %v75, %v75
    %v104 = vpack.c.bf16 %v74, %v74
    %v105 = vpack.c.bf16 %v76, %v76
    %v106 = vpack.c.bf16 %v84, %v84
    %v107 = vpack.c.bf16 %v92, %v92
    %v108 = vpack.c.bf16 %v91, %v91
    %v109 = vpack.c.bf16 %v93, %v93
    %v110 = vld [vmem:[#allocation2] sm:$0xff]
    %v111 = vld [vmem:[#allocation2 + $0x8] sm:$0xff]
    %v112 = vld [vmem:[#allocation2 + $0x10] sm:$0xff]
    %v113 = vld [vmem:[#allocation2 + $0x18] sm:$0xff]
    %v114 = vld [vmem:[#allocation2 + $0x20] sm:$0xff]
    %v115 = vld [vmem:[#allocation2 + $0x28] sm:$0xff]
    %v116 = vld [vmem:[#allocation2 + $0x30] sm:$0xff]
    %v117 = vld [vmem:[#allocation2 + $0x38] sm:$0xff]
    %v118 = vld [vmem:[#allocation2 + $0x40] sm:$0xff]
    %v119 = vld [vmem:[#allocation2 + $0x48] sm:$0xff]
    %v120 = vld [vmem:[#allocation2 + $0x50] sm:$0xff]
    %v121 = vld [vmem:[#allocation2 + $0x58] sm:$0xff]
    %v122 = vld [vmem:[#allocation2 + $0x60] sm:$0xff]
    %v123 = vld [vmem:[#allocation2 + $0x68] sm:$0xff]
    %v124 = vld [vmem:[#allocation2 + $0x70] sm:$0xff]
    %v125 = vld [vmem:[#allocation2 + $0x78] sm:$0xff]
    %v126 = vld [vmem:[#allocation2 + $0x80] sm:$0xff]
    %v127 = vld [vmem:[#allocation2 + $0x88] sm:$0xff]
    %v128 = vld [vmem:[#allocation2 + $0x90] sm:$0xff]
    %v129 = vld [vmem:[#allocation2 + $0x98] sm:$0xff]
    %v130 = vld [vmem:[#allocation2 + $0xa0] sm:$0xff]
    %v131 = vld [vmem:[#allocation2 + $0xa8] sm:$0xff]
    %v132 = vld [vmem:[#allocation2 + $0xb0] sm:$0xff]
    %v133 = vld [vmem:[#allocation2 + $0xb8] sm:$0xff]
    %v134 = vld [vmem:[#allocation2 + $0xc0] sm:$0xff]
    %v135 = vld [vmem:[#allocation2 + $0xc8] sm:$0xff]
    %v136 = vld [vmem:[#allocation2 + $0xd0] sm:$0xff]
    %v137 = vld [vmem:[#allocation2 + $0xd8] sm:$0xff]
    %v138 = vld [vmem:[#allocation2 + $0xe0] sm:$0xff]
    %v139 = vld [vmem:[#allocation2 + $0xe8] sm:$0xff]
    %v140 = vld [vmem:[#allocation2 + $0xf0] sm:$0xff]
    %v141 = vld [vmem:[#allocation2 + $0xf8] sm:$0xff]
    %v142 = vld [vmem:[#allocation2 + $0x100] sm:$0xff]
    %v143 = vld [vmem:[#allocation2 + $0x108] sm:$0xff]
    %v144 = vld [vmem:[#allocation2 + $0x110] sm:$0xff]
    %v145 = vld [vmem:[#allocation2 + $0x118] sm:$0xff]
    %v146 = vld [vmem:[#allocation2 + $0x120] sm:$0xff]
    %v147 = vld [vmem:[#allocation2 + $0x128] sm:$0xff]
    %v148 = vld [vmem:[#allocation2 + $0x130] sm:$0xff]
    %v149 = vld [vmem:[#allocation2 + $0x138] sm:$0xff]
    %v150 = vld [vmem:[#allocation2 + $0x140] sm:$0xff]
    %v151 = vld [vmem:[#allocation2 + $0x148] sm:$0xff]
    %v152 = vld [vmem:[#allocation2 + $0x150] sm:$0xff]
    %v153 = vld [vmem:[#allocation2 + $0x158] sm:$0xff]
    %v154 = vld [vmem:[#allocation2 + $0x160] sm:$0xff]
    %v155 = vld [vmem:[#allocation2 + $0x168] sm:$0xff]
    %v156 = vld [vmem:[#allocation2 + $0x170] sm:$0xff]
    %v157 = vld [vmem:[#allocation2 + $0x178] sm:$0xff]
    %v158 = vld [vmem:[#allocation2 + $0x180] sm:$0xff]
    %v159 = vld [vmem:[#allocation2 + $0x188] sm:$0xff]
    %v160 = vld [vmem:[#allocation2 + $0x190] sm:$0xff]
    %v161 = vld [vmem:[#allocation2 + $0x198] sm:$0xff]
    %v162 = vld [vmem:[#allocation2 + $0x1a0] sm:$0xff]
    %v163 = vld [vmem:[#allocation2 + $0x1a8] sm:$0xff]
    %v164 = vld [vmem:[#allocation2 + $0x1b0] sm:$0xff]
    %v165 = vld [vmem:[#allocation2 + $0x1b8] sm:$0xff]
    %v166 = vld [vmem:[#allocation2 + $0x1c0] sm:$0xff]
    %v167 = vld [vmem:[#allocation2 + $0x1c8] sm:$0xff]
    %v168 = vld [vmem:[#allocation2 + $0x1d0] sm:$0xff]
    %v169 = vld [vmem:[#allocation2 + $0x1d8] sm:$0xff]
    %v170 = vld [vmem:[#allocation2 + $0x1e0] sm:$0xff]
    %v171 = vld [vmem:[#allocation2 + $0x1e8] sm:$0xff]
    %v172 = vld [vmem:[#allocation2 + $0x1f0] sm:$0xff]
    %v173 = vld [vmem:[#allocation2 + $0x1f8] sm:$0xff]
    %v174 = vld [vmem:[#allocation2 + $0x200] sm:$0xff]
    %v175 = vld [vmem:[#allocation2 + $0x208] sm:$0xff]
    %v176 = vld [vmem:[#allocation2 + $0x210] sm:$0xff]
    %v177 = vld [vmem:[#allocation2 + $0x218] sm:$0xff]
    %v178 = vld [vmem:[#allocation2 + $0x220] sm:$0xff]
    %v179 = vld [vmem:[#allocation2 + $0x228] sm:$0xff]
    %v180 = vld [vmem:[#allocation2 + $0x230] sm:$0xff]
    %v181 = vld [vmem:[#allocation2 + $0x238] sm:$0xff]
    %v182 = vld [vmem:[#allocation2 + $0x240] sm:$0xff]
    %v183 = vld [vmem:[#allocation2 + $0x248] sm:$0xff]
    %v184 = vld [vmem:[#allocation2 + $0x250] sm:$0xff]
    %v185 = vld [vmem:[#allocation2 + $0x258] sm:$0xff]
    %v186 = vld [vmem:[#allocation2 + $0x260] sm:$0xff]
    %v187 = vld [vmem:[#allocation2 + $0x268] sm:$0xff]
    %v188 = vld [vmem:[#allocation2 + $0x270] sm:$0xff]
    %v189 = vld [vmem:[#allocation2 + $0x278] sm:$0xff]
    %v190 = vld [vmem:[#allocation2 + $0x280] sm:$0xff]
    %v191 = vld [vmem:[#allocation2 + $0x288] sm:$0xff]
    %v192 = vld [vmem:[#allocation2 + $0x290] sm:$0xff]
    %v193 = vld [vmem:[#allocation2 + $0x298] sm:$0xff]
    %v194 = vld [vmem:[#allocation2 + $0x2a0] sm:$0xff]
    %v195 = vld [vmem:[#allocation2 + $0x2a8] sm:$0xff]
    %v196 = vld [vmem:[#allocation2 + $0x2b0] sm:$0xff]
    %v197 = vld [vmem:[#allocation2 + $0x2b8] sm:$0xff]
    %v198 = vld [vmem:[#allocation2 + $0x2c0] sm:$0xff]
    %v199 = vld [vmem:[#allocation2 + $0x2c8] sm:$0xff]
    %v200 = vld [vmem:[#allocation2 + $0x2d0] sm:$0xff]
    %v201 = vld [vmem:[#allocation2 + $0x2d8] sm:$0xff]
    %v202 = vld [vmem:[#allocation2 + $0x2e0] sm:$0xff]
    %v203 = vld [vmem:[#allocation2 + $0x2e8] sm:$0xff]
    %v204 = vld [vmem:[#allocation2 + $0x2f0] sm:$0xff]
    %v205 = vld [vmem:[#allocation2 + $0x2f8] sm:$0xff]
    %v206 = vld [vmem:[#allocation2 + $0x300] sm:$0xff]
    %v207 = vld [vmem:[#allocation2 + $0x308] sm:$0xff]
    %v208 = vld [vmem:[#allocation2 + $0x310] sm:$0xff]
    %v209 = vld [vmem:[#allocation2 + $0x318] sm:$0xff]
    %v210 = vld [vmem:[#allocation2 + $0x320] sm:$0xff]
    %v211 = vld [vmem:[#allocation2 + $0x328] sm:$0xff]
    %v212 = vld [vmem:[#allocation2 + $0x330] sm:$0xff]
    %v213 = vld [vmem:[#allocation2 + $0x338] sm:$0xff]
    %v214 = vld [vmem:[#allocation2 + $0x340] sm:$0xff]
    %v215 = vld [vmem:[#allocation2 + $0x348] sm:$0xff]
    %v216 = vld [vmem:[#allocation2 + $0x350] sm:$0xff]
    %v217 = vld [vmem:[#allocation2 + $0x358] sm:$0xff]
    %v218 = vld [vmem:[#allocation2 + $0x360] sm:$0xff]
    %v219 = vld [vmem:[#allocation2 + $0x368] sm:$0xff]
    %v220 = vld [vmem:[#allocation2 + $0x370] sm:$0xff]
    %v221 = vld [vmem:[#allocation2 + $0x378] sm:$0xff]
    %v222 = vld [vmem:[#allocation2 + $0x380] sm:$0xff]
    %v223 = vld [vmem:[#allocation2 + $0x388] sm:$0xff]
    %v224 = vld [vmem:[#allocation2 + $0x390] sm:$0xff]
    %v225 = vld [vmem:[#allocation2 + $0x398] sm:$0xff]
    %v226 = vld [vmem:[#allocation2 + $0x3a0] sm:$0xff]
    %v227 = vld [vmem:[#allocation2 + $0x3a8] sm:$0xff]
    %v228 = vld [vmem:[#allocation2 + $0x3b0] sm:$0xff]
    %v229 = vld [vmem:[#allocation2 + $0x3b8] sm:$0xff]
    %v230 = vld [vmem:[#allocation2 + $0x3c0] sm:$0xff]
    %v231 = vld [vmem:[#allocation2 + $0x3c8] sm:$0xff]
    %v232 = vld [vmem:[#allocation2 + $0x3d0] sm:$0xff]
    %v233 = vld [vmem:[#allocation2 + $0x3d8] sm:$0xff]
    %v234 = vld [vmem:[#allocation2 + $0x3e0] sm:$0xff]
    %v235 = vld [vmem:[#allocation2 + $0x3e8] sm:$0xff]
    %v236 = vld [vmem:[#allocation2 + $0x3f0] sm:$0xff]
    %v237 = vld [vmem:[#allocation2 + $0x3f8] sm:$0xff]
    %v238 = vld [vmem:[#allocation2 + $0x400] sm:$0xff]
    %v239 = vld [vmem:[#allocation2 + $0x408] sm:$0xff]
    %v240 = vld [vmem:[#allocation2 + $0x410] sm:$0xff]
    %v241 = vld [vmem:[#allocation2 + $0x418] sm:$0xff]
    %v242 = vld [vmem:[#allocation2 + $0x420] sm:$0xff]
    %v243 = vld [vmem:[#allocation2 + $0x428] sm:$0xff]
    %v244 = vld [vmem:[#allocation2 + $0x430] sm:$0xff]
    %v245 = vld [vmem:[#allocation2 + $0x438] sm:$0xff]
    %v246 = vld [vmem:[#allocation2 + $0x440] sm:$0xff]
    %v247 = vld [vmem:[#allocation2 + $0x448] sm:$0xff]
    %v248 = vld [vmem:[#allocation2 + $0x450] sm:$0xff]
    %v249 = vld [vmem:[#allocation2 + $0x458] sm:$0xff]
    %v250 = vld [vmem:[#allocation2 + $0x460] sm:$0xff]
    %v251 = vld [vmem:[#allocation2 + $0x468] sm:$0xff]
    %v252 = vld [vmem:[#allocation2 + $0x470] sm:$0xff]
    %v253 = vld [vmem:[#allocation2 + $0x478] sm:$0xff]
    %v254 = vld [vmem:[#allocation2 + $0x480] sm:$0xff]
    %v255 = vld [vmem:[#allocation2 + $0x488] sm:$0xff]
    %v256 = vld [vmem:[#allocation2 + $0x490] sm:$0xff]
    %v257 = vld [vmem:[#allocation2 + $0x498] sm:$0xff]
    %v258 = vld [vmem:[#allocation2 + $0x4a0] sm:$0xff]
    %v259 = vld [vmem:[#allocation2 + $0x4a8] sm:$0xff]
    %v260 = vld [vmem:[#allocation2 + $0x4b0] sm:$0xff]
    %v261 = vld [vmem:[#allocation2 + $0x4b8] sm:$0xff]
    %v262 = vld [vmem:[#allocation2 + $0x4c0] sm:$0xff]
    %v263 = vld [vmem:[#allocation2 + $0x4c8] sm:$0xff]
    %v264 = vld [vmem:[#allocation2 + $0x4d0] sm:$0xff]
    %v265 = vld [vmem:[#allocation2 + $0x4d8] sm:$0xff]
    %v266 = vld [vmem:[#allocation2 + $0x4e0] sm:$0xff]
    %v267 = vld [vmem:[#allocation2 + $0x4e8] sm:$0xff]
    %v268 = vld [vmem:[#allocation2 + $0x4f0] sm:$0xff]
    %v269 = vld [vmem:[#allocation2 + $0x4f8] sm:$0xff]
    %v270 = vld [vmem:[#allocation2 + $0x500] sm:$0xff]
    %v271 = vld [vmem:[#allocation2 + $0x508] sm:$0xff]
    %v272 = vld [vmem:[#allocation2 + $0x510] sm:$0xff]
    %v273 = vld [vmem:[#allocation2 + $0x518] sm:$0xff]
    %v274 = vld [vmem:[#allocation2 + $0x520] sm:$0xff]
    %v275 = vld [vmem:[#allocation2 + $0x528] sm:$0xff]
    %v276 = vld [vmem:[#allocation2 + $0x530] sm:$0xff]
    %v277 = vld [vmem:[#allocation2 + $0x538] sm:$0xff]
    %v278 = vld [vmem:[#allocation2 + $0x540] sm:$0xff]
    %v279 = vld [vmem:[#allocation2 + $0x548] sm:$0xff]
    %v280 = vld [vmem:[#allocation2 + $0x550] sm:$0xff]
    %v281 = vld [vmem:[#allocation2 + $0x558] sm:$0xff]
    %v282 = vld [vmem:[#allocation2 + $0x560] sm:$0xff]
    %v283 = vld [vmem:[#allocation2 + $0x568] sm:$0xff]
    %v284 = vld [vmem:[#allocation2 + $0x570] sm:$0xff]
    %v285 = vld [vmem:[#allocation2 + $0x578] sm:$0xff]
    %v286 = vld [vmem:[#allocation2 + $0x580] sm:$0xff]
    %v287 = vld [vmem:[#allocation2 + $0x588] sm:$0xff]
    %v288 = vld [vmem:[#allocation2 + $0x590] sm:$0xff]
    %v289 = vld [vmem:[#allocation2 + $0x598] sm:$0xff]
    %v290 = vld [vmem:[#allocation2 + $0x5a0] sm:$0xff]
    %v291 = vld [vmem:[#allocation2 + $0x5a8] sm:$0xff]
    %v292 = vld [vmem:[#allocation2 + $0x5b0] sm:$0xff]
    %v293 = vld [vmem:[#allocation2 + $0x5b8] sm:$0xff]
    %v294 = vld [vmem:[#allocation2 + $0x5c0] sm:$0xff]
    %v295 = vld [vmem:[#allocation2 + $0x5c8] sm:$0xff]
    %v296 = vld [vmem:[#allocation2 + $0x5d0] sm:$0xff]
    %v297 = vld [vmem:[#allocation2 + $0x5d8] sm:$0xff]
    %v298 = vld [vmem:[#allocation2 + $0x5e0] sm:$0xff]
    %v299 = vld [vmem:[#allocation2 + $0x5e8] sm:$0xff]
    %v300 = vld [vmem:[#allocation2 + $0x5f0] sm:$0xff]
    %v301 = vld [vmem:[#allocation2 + $0x5f8] sm:$0xff]
    %v302 = vld [vmem:[#allocation2 + $0x600] sm:$0xff]
    %v303 = vld [vmem:[#allocation2 + $0x608] sm:$0xff]
    %v304 = vld [vmem:[#allocation2 + $0x610] sm:$0xff]
    %v305 = vld [vmem:[#allocation2 + $0x618] sm:$0xff]
    %v306 = vld [vmem:[#allocation2 + $0x620] sm:$0xff]
    %v307 = vld [vmem:[#allocation2 + $0x628] sm:$0xff]
    %v308 = vld [vmem:[#allocation2 + $0x630] sm:$0xff]
    %v309 = vld [vmem:[#allocation2 + $0x638] sm:$0xff]
    %v310 = vld [vmem:[#allocation2 + $0x640] sm:$0xff]
    %v311 = vld [vmem:[#allocation2 + $0x648] sm:$0xff]
    %v312 = vld [vmem:[#allocation2 + $0x650] sm:$0xff]
    %v313 = vld [vmem:[#allocation2 + $0x658] sm:$0xff]
    %v314 = vld [vmem:[#allocation2 + $0x660] sm:$0xff]
    %v315 = vld [vmem:[#allocation2 + $0x668] sm:$0xff]
    %v316 = vld [vmem:[#allocation2 + $0x670] sm:$0xff]
    %v317 = vld [vmem:[#allocation2 + $0x678] sm:$0xff]
    %v318 = vld [vmem:[#allocation2 + $0x680] sm:$0xff]
    %v319 = vld [vmem:[#allocation2 + $0x688] sm:$0xff]
    %v320 = vld [vmem:[#allocation2 + $0x690] sm:$0xff]
    %v321 = vld [vmem:[#allocation2 + $0x698] sm:$0xff]
    %v322 = vld [vmem:[#allocation2 + $0x6a0] sm:$0xff]
    %v323 = vld [vmem:[#allocation2 + $0x6a8] sm:$0xff]
    %v324 = vld [vmem:[#allocation2 + $0x6b0] sm:$0xff]
    %v325 = vld [vmem:[#allocation2 + $0x6b8] sm:$0xff]
    %v326 = vld [vmem:[#allocation2 + $0x6c0] sm:$0xff]
    %v327 = vld [vmem:[#allocation2 + $0x6c8] sm:$0xff]
    %v328 = vld [vmem:[#allocation2 + $0x6d0] sm:$0xff]
    %v329 = vld [vmem:[#allocation2 + $0x6d8] sm:$0xff]
    %v330 = vld [vmem:[#allocation2 + $0x6e0] sm:$0xff]
    %v331 = vld [vmem:[#allocation2 + $0x6e8] sm:$0xff]
    %v332 = vld [vmem:[#allocation2 + $0x6f0] sm:$0xff]
    %v333 = vld [vmem:[#allocation2 + $0x6f8] sm:$0xff]
    %v334 = vld [vmem:[#allocation2 + $0x700] sm:$0xff]
    %v335 = vld [vmem:[#allocation2 + $0x708] sm:$0xff]
    %v336 = vld [vmem:[#allocation2 + $0x710] sm:$0xff]
    %v337 = vld [vmem:[#allocation2 + $0x718] sm:$0xff]
    %v338 = vld [vmem:[#allocation2 + $0x720] sm:$0xff]
    %v339 = vld [vmem:[#allocation2 + $0x728] sm:$0xff]
    %v340 = vld [vmem:[#allocation2 + $0x730] sm:$0xff]
    %v341 = vld [vmem:[#allocation2 + $0x738] sm:$0xff]
    %v342 = vld [vmem:[#allocation2 + $0x740] sm:$0xff]
    %v343 = vld [vmem:[#allocation2 + $0x748] sm:$0xff]
    %v344 = vld [vmem:[#allocation2 + $0x750] sm:$0xff]
    %v345 = vld [vmem:[#allocation2 + $0x758] sm:$0xff]
    %v346 = vld [vmem:[#allocation2 + $0x760] sm:$0xff]
    %v347 = vld [vmem:[#allocation2 + $0x768] sm:$0xff]
    %v348 = vld [vmem:[#allocation2 + $0x770] sm:$0xff]
    %v349 = vld [vmem:[#allocation2 + $0x778] sm:$0xff]
    %v350 = vld [vmem:[#allocation2 + $0x780] sm:$0xff]
    %v351 = vld [vmem:[#allocation2 + $0x788] sm:$0xff]
    %v352 = vld [vmem:[#allocation2 + $0x790] sm:$0xff]
    %v353 = vld [vmem:[#allocation2 + $0x798] sm:$0xff]
    %v354 = vld [vmem:[#allocation2 + $0x7a0] sm:$0xff]
    %v355 = vld [vmem:[#allocation2 + $0x7a8] sm:$0xff]
    %v356 = vld [vmem:[#allocation2 + $0x7b0] sm:$0xff]
    %v357 = vld [vmem:[#allocation2 + $0x7b8] sm:$0xff]
    %v358 = vld [vmem:[#allocation2 + $0x7c0] sm:$0xff]
    %v359 = vld [vmem:[#allocation2 + $0x7c8] sm:$0xff]
    %v360 = vld [vmem:[#allocation2 + $0x7d0] sm:$0xff]
    %v361 = vld [vmem:[#allocation2 + $0x7d8] sm:$0xff]
    %v362 = vld [vmem:[#allocation2 + $0x7e0] sm:$0xff]
    %v363 = vld [vmem:[#allocation2 + $0x7e8] sm:$0xff]
    %v364 = vld [vmem:[#allocation2 + $0x7f0] sm:$0xff]
    %v365 = vld [vmem:[#allocation2 + $0x7f8] sm:$0xff]
    %v366 = vld [vmem:[%s2] sm:$0xf]
    %v368 = vlaneseq
    %v369 = vshrl.u32 %v368, 7
    %v370 = vsub.s32 0, %v369
    %v371 = vrot.slane %v366, %v370
    %v372 = vlaneseq
    %v373 = vshrl.u32 %v372, 7
    %v374 = vsub.s32 1, %v373
    %v375 = vrot.slane %v366, %v374
    %v376 = vlaneseq
    %v377 = vshrl.u32 %v376, 7
    %v378 = vsub.s32 2, %v377
    %v379 = vrot.slane %v366, %v378
    %v380 = vlaneseq
    %v381 = vshrl.u32 %v380, 7
    %v382 = vsub.s32 3, %v381
    %v383 = vrot.slane %v366, %v382
    %v644 = vunpack.c.l.b16 %v110
    %v645 = vunpack.c.h.b16 %v110
    %v646 = vunpack.c.l.b16 %v111
    %v647 = vunpack.c.h.b16 %v111
    %v648 = vunpack.c.l.b16 %v112
    %v649 = vunpack.c.h.b16 %v112
    %v650 = vunpack.c.l.b16 %v113
    %v651 = vunpack.c.h.b16 %v113
    %v652 = vunpack.c.l.b16 %v114
    %v653 = vunpack.c.h.b16 %v114
    %v654 = vunpack.c.l.b16 %v115
    %v655 = vunpack.c.h.b16 %v115
    %v656 = vunpack.c.l.b16 %v116
    %v657 = vunpack.c.h.b16 %v116
    %v658 = vunpack.c.l.b16 %v117
    %v659 = vunpack.c.h.b16 %v117
    %v660 = vunpack.c.l.b16 %v118
    %v661 = vunpack.c.h.b16 %v118
    %v662 = vunpack.c.l.b16 %v119
    %v663 = vunpack.c.h.b16 %v119
    %v664 = vunpack.c.l.b16 %v120
    %v665 = vunpack.c.h.b16 %v120
    %v666 = vunpack.c.l.b16 %v121
    %v667 = vunpack.c.h.b16 %v121
    %v668 = vunpack.c.l.b16 %v122
    %v669 = vunpack.c.h.b16 %v122
    %v670 = vunpack.c.l.b16 %v123
    %v671 = vunpack.c.h.b16 %v123
    %v672 = vunpack.c.l.b16 %v124
    %v673 = vunpack.c.h.b16 %v124
    %v674 = vunpack.c.l.b16 %v125
    %v675 = vunpack.c.h.b16 %v125
    %v676 = vunpack.c.l.b16 %v126
    %v677 = vunpack.c.h.b16 %v126
    %v678 = vunpack.c.l.b16 %v127
    %v679 = vunpack.c.h.b16 %v127
    %v680 = vunpack.c.l.b16 %v128
    %v681 = vunpack.c.h.b16 %v128
    %v682 = vunpack.c.l.b16 %v129
    %v683 = vunpack.c.h.b16 %v129
    %v684 = vunpack.c.l.b16 %v130
    %v685 = vunpack.c.h.b16 %v130
    %v686 = vunpack.c.l.b16 %v131
    %v687 = vunpack.c.h.b16 %v131
    %v688 = vunpack.c.l.b16 %v132
    %v689 = vunpack.c.h.b16 %v132
    %v690 = vunpack.c.l.b16 %v133
    %v691 = vunpack.c.h.b16 %v133
    %v692 = vunpack.c.l.b16 %v134
    %v693 = vunpack.c.h.b16 %v134
    %v694 = vunpack.c.l.b16 %v135
    %v695 = vunpack.c.h.b16 %v135
    %v696 = vunpack.c.l.b16 %v136
    %v697 = vunpack.c.h.b16 %v136
    %v698 = vunpack.c.l.b16 %v137
    %v699 = vunpack.c.h.b16 %v137
    %v700 = vunpack.c.l.b16 %v138
    %v701 = vunpack.c.h.b16 %v138
    %v702 = vunpack.c.l.b16 %v139
    %v703 = vunpack.c.h.b16 %v139
    %v704 = vunpack.c.l.b16 %v140
    %v705 = vunpack.c.h.b16 %v140
    %v706 = vunpack.c.l.b16 %v141
    %v707 = vunpack.c.h.b16 %v141
    %v708 = vunpack.c.l.b16 %v142
    %v709 = vunpack.c.h.b16 %v142
    %v710 = vunpack.c.l.b16 %v143
    %v711 = vunpack.c.h.b16 %v143
    %v712 = vunpack.c.l.b16 %v144
    %v713 = vunpack.c.h.b16 %v144
    %v714 = vunpack.c.l.b16 %v145
    %v715 = vunpack.c.h.b16 %v145
    %v716 = vunpack.c.l.b16 %v146
    %v717 = vunpack.c.h.b16 %v146
    %v718 = vunpack.c.l.b16 %v147
    %v719 = vunpack.c.h.b16 %v147
    %v720 = vunpack.c.l.b16 %v148
    %v721 = vunpack.c.h.b16 %v148
    %v722 = vunpack.c.l.b16 %v149
    %v723 = vunpack.c.h.b16 %v149
    %v724 = vunpack.c.l.b16 %v150
    %v725 = vunpack.c.h.b16 %v150
    %v726 = vunpack.c.l.b16 %v151
    %v727 = vunpack.c.h.b16 %v151
    %v728 = vunpack.c.l.b16 %v152
    %v729 = vunpack.c.h.b16 %v152
    %v730 = vunpack.c.l.b16 %v153
    %v731 = vunpack.c.h.b16 %v153
    %v732 = vunpack.c.l.b16 %v154
    %v733 = vunpack.c.h.b16 %v154
    %v734 = vunpack.c.l.b16 %v155
    %v735 = vunpack.c.h.b16 %v155
    %v736 = vunpack.c.l.b16 %v156
    %v737 = vunpack.c.h.b16 %v156
    %v738 = vunpack.c.l.b16 %v157
    %v739 = vunpack.c.h.b16 %v157
    %v740 = vunpack.c.l.b16 %v158
    %v741 = vunpack.c.h.b16 %v158
    %v742 = vunpack.c.l.b16 %v159
    %v743 = vunpack.c.h.b16 %v159
    %v744 = vunpack.c.l.b16 %v160
    %v745 = vunpack.c.h.b16 %v160
    %v746 = vunpack.c.l.b16 %v161
    %v747 = vunpack.c.h.b16 %v161
    %v748 = vunpack.c.l.b16 %v162
    %v749 = vunpack.c.h.b16 %v162
    %v750 = vunpack.c.l.b16 %v163
    %v751 = vunpack.c.h.b16 %v163
    %v752 = vunpack.c.l.b16 %v164
    %v753 = vunpack.c.h.b16 %v164
    %v754 = vunpack.c.l.b16 %v165
    %v755 = vunpack.c.h.b16 %v165
    %v756 = vunpack.c.l.b16 %v166
    %v757 = vunpack.c.h.b16 %v166
    %v758 = vunpack.c.l.b16 %v167
    %v759 = vunpack.c.h.b16 %v167
    %v760 = vunpack.c.l.b16 %v168
    %v761 = vunpack.c.h.b16 %v168
    %v762 = vunpack.c.l.b16 %v169
    %v763 = vunpack.c.h.b16 %v169
    %v764 = vunpack.c.l.b16 %v170
    %v765 = vunpack.c.h.b16 %v170
    %v766 = vunpack.c.l.b16 %v171
    %v767 = vunpack.c.h.b16 %v171
    %v768 = vunpack.c.l.b16 %v172
    %v769 = vunpack.c.h.b16 %v172
    %v770 = vunpack.c.l.b16 %v173
    %v771 = vunpack.c.h.b16 %v173
    %v772 = vunpack.c.l.b16 %v174
    %v773 = vunpack.c.h.b16 %v174
    %v774 = vunpack.c.l.b16 %v175
    %v775 = vunpack.c.h.b16 %v175
    %v776 = vunpack.c.l.b16 %v176
    %v777 = vunpack.c.h.b16 %v176
    %v778 = vunpack.c.l.b16 %v177
    %v779 = vunpack.c.h.b16 %v177
    %v780 = vunpack.c.l.b16 %v178
    %v781 = vunpack.c.h.b16 %v178
    %v782 = vunpack.c.l.b16 %v179
    %v783 = vunpack.c.h.b16 %v179
    %v784 = vunpack.c.l.b16 %v180
    %v785 = vunpack.c.h.b16 %v180
    %v786 = vunpack.c.l.b16 %v181
    %v787 = vunpack.c.h.b16 %v181
    %v788 = vunpack.c.l.b16 %v182
    %v789 = vunpack.c.h.b16 %v182
    %v790 = vunpack.c.l.b16 %v183
    %v791 = vunpack.c.h.b16 %v183
    %v792 = vunpack.c.l.b16 %v184
    %v793 = vunpack.c.h.b16 %v184
    %v794 = vunpack.c.l.b16 %v185
    %v795 = vunpack.c.h.b16 %v185
    %v796 = vunpack.c.l.b16 %v186
    %v797 = vunpack.c.h.b16 %v186
    %v798 = vunpack.c.l.b16 %v187
    %v799 = vunpack.c.h.b16 %v187
    %v800 = vunpack.c.l.b16 %v188
    %v801 = vunpack.c.h.b16 %v188
    %v802 = vunpack.c.l.b16 %v189
    %v803 = vunpack.c.h.b16 %v189
    %v804 = vunpack.c.l.b16 %v190
    %v805 = vunpack.c.h.b16 %v190
    %v806 = vunpack.c.l.b16 %v191
    %v807 = vunpack.c.h.b16 %v191
    %v808 = vunpack.c.l.b16 %v192
    %v809 = vunpack.c.h.b16 %v192
    %v810 = vunpack.c.l.b16 %v193
    %v811 = vunpack.c.h.b16 %v193
    %v812 = vunpack.c.l.b16 %v194
    %v813 = vunpack.c.h.b16 %v194
    %v814 = vunpack.c.l.b16 %v195
    %v815 = vunpack.c.h.b16 %v195
    %v816 = vunpack.c.l.b16 %v196
    %v817 = vunpack.c.h.b16 %v196
    %v818 = vunpack.c.l.b16 %v197
    %v819 = vunpack.c.h.b16 %v197
    %v820 = vunpack.c.l.b16 %v198
    %v821 = vunpack.c.h.b16 %v198
    %v822 = vunpack.c.l.b16 %v199
    %v823 = vunpack.c.h.b16 %v199
    %v824 = vunpack.c.l.b16 %v200
    %v825 = vunpack.c.h.b16 %v200
    %v826 = vunpack.c.l.b16 %v201
    %v827 = vunpack.c.h.b16 %v201
    %v828 = vunpack.c.l.b16 %v202
    %v829 = vunpack.c.h.b16 %v202
    %v830 = vunpack.c.l.b16 %v203
    %v831 = vunpack.c.h.b16 %v203
    %v832 = vunpack.c.l.b16 %v204
    %v833 = vunpack.c.h.b16 %v204
    %v834 = vunpack.c.l.b16 %v205
    %v835 = vunpack.c.h.b16 %v205
    %v836 = vunpack.c.l.b16 %v206
    %v837 = vunpack.c.h.b16 %v206
    %v838 = vunpack.c.l.b16 %v207
    %v839 = vunpack.c.h.b16 %v207
    %v840 = vunpack.c.l.b16 %v208
    %v841 = vunpack.c.h.b16 %v208
    %v842 = vunpack.c.l.b16 %v209
    %v843 = vunpack.c.h.b16 %v209
    %v844 = vunpack.c.l.b16 %v210
    %v845 = vunpack.c.h.b16 %v210
    %v846 = vunpack.c.l.b16 %v211
    %v847 = vunpack.c.h.b16 %v211
    %v848 = vunpack.c.l.b16 %v212
    %v849 = vunpack.c.h.b16 %v212
    %v850 = vunpack.c.l.b16 %v213
    %v851 = vunpack.c.h.b16 %v213
    %v852 = vunpack.c.l.b16 %v214
    %v853 = vunpack.c.h.b16 %v214
    %v854 = vunpack.c.l.b16 %v215
    %v855 = vunpack.c.h.b16 %v215
    %v856 = vunpack.c.l.b16 %v216
    %v857 = vunpack.c.h.b16 %v216
    %v858 = vunpack.c.l.b16 %v217
    %v859 = vunpack.c.h.b16 %v217
    %v860 = vunpack.c.l.b16 %v218
    %v861 = vunpack.c.h.b16 %v218
    %v862 = vunpack.c.l.b16 %v219
    %v863 = vunpack.c.h.b16 %v219
    %v864 = vunpack.c.l.b16 %v220
    %v865 = vunpack.c.h.b16 %v220
    %v866 = vunpack.c.l.b16 %v221
    %v867 = vunpack.c.h.b16 %v221
    %v868 = vunpack.c.l.b16 %v222
    %v869 = vunpack.c.h.b16 %v222
    %v870 = vunpack.c.l.b16 %v223
    %v871 = vunpack.c.h.b16 %v223
    %v872 = vunpack.c.l.b16 %v224
    %v873 = vunpack.c.h.b16 %v224
    %v874 = vunpack.c.l.b16 %v225
    %v875 = vunpack.c.h.b16 %v225
    %v876 = vunpack.c.l.b16 %v226
    %v877 = vunpack.c.h.b16 %v226
    %v878 = vunpack.c.l.b16 %v227
    %v879 = vunpack.c.h.b16 %v227
    %v880 = vunpack.c.l.b16 %v228
    %v881 = vunpack.c.h.b16 %v228
    %v882 = vunpack.c.l.b16 %v229
    %v883 = vunpack.c.h.b16 %v229
    %v884 = vunpack.c.l.b16 %v230
    %v885 = vunpack.c.h.b16 %v230
    %v886 = vunpack.c.l.b16 %v231
    %v887 = vunpack.c.h.b16 %v231
    %v888 = vunpack.c.l.b16 %v232
    %v889 = vunpack.c.h.b16 %v232
    %v890 = vunpack.c.l.b16 %v233
    %v891 = vunpack.c.h.b16 %v233
    %v892 = vunpack.c.l.b16 %v234
    %v893 = vunpack.c.h.b16 %v234
    %v894 = vunpack.c.l.b16 %v235
    %v895 = vunpack.c.h.b16 %v235
    %v896 = vunpack.c.l.b16 %v236
    %v897 = vunpack.c.h.b16 %v236
    %v898 = vunpack.c.l.b16 %v237
    %v899 = vunpack.c.h.b16 %v237
    %v900 = vunpack.c.l.b16 %v238
    %v901 = vunpack.c.h.b16 %v238
    %v902 = vunpack.c.l.b16 %v239
    %v903 = vunpack.c.h.b16 %v239
    %v904 = vunpack.c.l.b16 %v240
    %v905 = vunpack.c.h.b16 %v240
    %v906 = vunpack.c.l.b16 %v241
    %v907 = vunpack.c.h.b16 %v241
    %v908 = vunpack.c.l.b16 %v242
    %v909 = vunpack.c.h.b16 %v242
    %v910 = vunpack.c.l.b16 %v243
    %v911 = vunpack.c.h.b16 %v243
    %v912 = vunpack.c.l.b16 %v244
    %v913 = vunpack.c.h.b16 %v244
    %v914 = vunpack.c.l.b16 %v245
    %v915 = vunpack.c.h.b16 %v245
    %v916 = vunpack.c.l.b16 %v246
    %v917 = vunpack.c.h.b16 %v246
    %v918 = vunpack.c.l.b16 %v247
    %v919 = vunpack.c.h.b16 %v247
    %v920 = vunpack.c.l.b16 %v248
    %v921 = vunpack.c.h.b16 %v248
    %v922 = vunpack.c.l.b16 %v249
    %v923 = vunpack.c.h.b16 %v249
    %v924 = vunpack.c.l.b16 %v250
    %v925 = vunpack.c.h.b16 %v250
    %v926 = vunpack.c.l.b16 %v251
    %v927 = vunpack.c.h.b16 %v251
    %v928 = vunpack.c.l.b16 %v252
    %v929 = vunpack.c.h.b16 %v252
    %v930 = vunpack.c.l.b16 %v253
    %v931 = vunpack.c.h.b16 %v253
    %v932 = vunpack.c.l.b16 %v254
    %v933 = vunpack.c.h.b16 %v254
    %v934 = vunpack.c.l.b16 %v255
    %v935 = vunpack.c.h.b16 %v255
    %v936 = vunpack.c.l.b16 %v256
    %v937 = vunpack.c.h.b16 %v256
    %v938 = vunpack.c.l.b16 %v257
    %v939 = vunpack.c.h.b16 %v257
    %v940 = vunpack.c.l.b16 %v258
    %v941 = vunpack.c.h.b16 %v258
    %v942 = vunpack.c.l.b16 %v259
    %v943 = vunpack.c.h.b16 %v259
    %v944 = vunpack.c.l.b16 %v260
    %v945 = vunpack.c.h.b16 %v260
    %v946 = vunpack.c.l.b16 %v261
    %v947 = vunpack.c.h.b16 %v261
    %v948 = vunpack.c.l.b16 %v262
    %v949 = vunpack.c.h.b16 %v262
    %v950 = vunpack.c.l.b16 %v263
    %v951 = vunpack.c.h.b16 %v263
    %v952 = vunpack.c.l.b16 %v264
    %v953 = vunpack.c.h.b16 %v264
    %v954 = vunpack.c.l.b16 %v265
    %v955 = vunpack.c.h.b16 %v265
    %v956 = vunpack.c.l.b16 %v266
    %v957 = vunpack.c.h.b16 %v266
    %v958 = vunpack.c.l.b16 %v267
    %v959 = vunpack.c.h.b16 %v267
    %v960 = vunpack.c.l.b16 %v268
    %v961 = vunpack.c.h.b16 %v268
    %v962 = vunpack.c.l.b16 %v269
    %v963 = vunpack.c.h.b16 %v269
    %v964 = vunpack.c.l.b16 %v270
    %v965 = vunpack.c.h.b16 %v270
    %v966 = vunpack.c.l.b16 %v271
    %v967 = vunpack.c.h.b16 %v271
    %v968 = vunpack.c.l.b16 %v272
    %v969 = vunpack.c.h.b16 %v272
    %v970 = vunpack.c.l.b16 %v273
    %v971 = vunpack.c.h.b16 %v273
    %v972 = vunpack.c.l.b16 %v274
    %v973 = vunpack.c.h.b16 %v274
    %v974 = vunpack.c.l.b16 %v275
    %v975 = vunpack.c.h.b16 %v275
    %v976 = vunpack.c.l.b16 %v276
    %v977 = vunpack.c.h.b16 %v276
    %v978 = vunpack.c.l.b16 %v277
    %v979 = vunpack.c.h.b16 %v277
    %v980 = vunpack.c.l.b16 %v278
    %v981 = vunpack.c.h.b16 %v278
    %v982 = vunpack.c.l.b16 %v279
    %v983 = vunpack.c.h.b16 %v279
    %v984 = vunpack.c.l.b16 %v280
    %v985 = vunpack.c.h.b16 %v280
    %v986 = vunpack.c.l.b16 %v281
    %v987 = vunpack.c.h.b16 %v281
    %v988 = vunpack.c.l.b16 %v282
    %v989 = vunpack.c.h.b16 %v282
    %v990 = vunpack.c.l.b16 %v283
    %v991 = vunpack.c.h.b16 %v283
    %v992 = vunpack.c.l.b16 %v284
    %v993 = vunpack.c.h.b16 %v284
    %v994 = vunpack.c.l.b16 %v285
    %v995 = vunpack.c.h.b16 %v285
    %v996 = vunpack.c.l.b16 %v286
    %v997 = vunpack.c.h.b16 %v286
    %v998 = vunpack.c.l.b16 %v287
    %v999 = vunpack.c.h.b16 %v287
    %v1000 = vunpack.c.l.b16 %v288
    %v1001 = vunpack.c.h.b16 %v288
    %v1002 = vunpack.c.l.b16 %v289
    %v1003 = vunpack.c.h.b16 %v289
    %v1004 = vunpack.c.l.b16 %v290
    %v1005 = vunpack.c.h.b16 %v290
    %v1006 = vunpack.c.l.b16 %v291
    %v1007 = vunpack.c.h.b16 %v291
    %v1008 = vunpack.c.l.b16 %v292
    %v1009 = vunpack.c.h.b16 %v292
    %v1010 = vunpack.c.l.b16 %v293
    %v1011 = vunpack.c.h.b16 %v293
    %v1012 = vunpack.c.l.b16 %v294
    %v1013 = vunpack.c.h.b16 %v294
    %v1014 = vunpack.c.l.b16 %v295
    %v1015 = vunpack.c.h.b16 %v295
    %v1016 = vunpack.c.l.b16 %v296
    %v1017 = vunpack.c.h.b16 %v296
    %v1018 = vunpack.c.l.b16 %v297
    %v1019 = vunpack.c.h.b16 %v297
    %v1020 = vunpack.c.l.b16 %v298
    %v1021 = vunpack.c.h.b16 %v298
    %v1022 = vunpack.c.l.b16 %v299
    %v1023 = vunpack.c.h.b16 %v299
    %v1024 = vunpack.c.l.b16 %v300
    %v1025 = vunpack.c.h.b16 %v300
    %v1026 = vunpack.c.l.b16 %v301
    %v1027 = vunpack.c.h.b16 %v301
    %v1028 = vunpack.c.l.b16 %v302
    %v1029 = vunpack.c.h.b16 %v302
    %v1030 = vunpack.c.l.b16 %v303
    %v1031 = vunpack.c.h.b16 %v303
    %v1032 = vunpack.c.l.b16 %v304
    %v1033 = vunpack.c.h.b16 %v304
    %v1034 = vunpack.c.l.b16 %v305
    %v1035 = vunpack.c.h.b16 %v305
    %v1036 = vunpack.c.l.b16 %v306
    %v1037 = vunpack.c.h.b16 %v306
    %v1038 = vunpack.c.l.b16 %v307
    %v1039 = vunpack.c.h.b16 %v307
    %v1040 = vunpack.c.l.b16 %v308
    %v1041 = vunpack.c.h.b16 %v308
    %v1042 = vunpack.c.l.b16 %v309
    %v1043 = vunpack.c.h.b16 %v309
    %v1044 = vunpack.c.l.b16 %v310
    %v1045 = vunpack.c.h.b16 %v310
    %v1046 = vunpack.c.l.b16 %v311
    %v1047 = vunpack.c.h.b16 %v311
    %v1048 = vunpack.c.l.b16 %v312
    %v1049 = vunpack.c.h.b16 %v312
    %v1050 = vunpack.c.l.b16 %v313
    %v1051 = vunpack.c.h.b16 %v313
    %v1052 = vunpack.c.l.b16 %v314
    %v1053 = vunpack.c.h.b16 %v314
    %v1054 = vunpack.c.l.b16 %v315
    %v1055 = vunpack.c.h.b16 %v315
    %v1056 = vunpack.c.l.b16 %v316
    %v1057 = vunpack.c.h.b16 %v316
    %v1058 = vunpack.c.l.b16 %v317
    %v1059 = vunpack.c.h.b16 %v317
    %v1060 = vunpack.c.l.b16 %v318
    %v1061 = vunpack.c.h.b16 %v318
    %v1062 = vunpack.c.l.b16 %v319
    %v1063 = vunpack.c.h.b16 %v319
    %v1064 = vunpack.c.l.b16 %v320
    %v1065 = vunpack.c.h.b16 %v320
    %v1066 = vunpack.c.l.b16 %v321
    %v1067 = vunpack.c.h.b16 %v321
    %v1068 = vunpack.c.l.b16 %v322
    %v1069 = vunpack.c.h.b16 %v322
    %v1070 = vunpack.c.l.b16 %v323
    %v1071 = vunpack.c.h.b16 %v323
    %v1072 = vunpack.c.l.b16 %v324
    %v1073 = vunpack.c.h.b16 %v324
    %v1074 = vunpack.c.l.b16 %v325
    %v1075 = vunpack.c.h.b16 %v325
    %v1076 = vunpack.c.l.b16 %v326
    %v1077 = vunpack.c.h.b16 %v326
    %v1078 = vunpack.c.l.b16 %v327
    %v1079 = vunpack.c.h.b16 %v327
    %v1080 = vunpack.c.l.b16 %v328
    %v1081 = vunpack.c.h.b16 %v328
    %v1082 = vunpack.c.l.b16 %v329
    %v1083 = vunpack.c.h.b16 %v329
    %v1084 = vunpack.c.l.b16 %v330
    %v1085 = vunpack.c.h.b16 %v330
    %v1086 = vunpack.c.l.b16 %v331
    %v1087 = vunpack.c.h.b16 %v331
    %v1088 = vunpack.c.l.b16 %v332
    %v1089 = vunpack.c.h.b16 %v332
    %v1090 = vunpack.c.l.b16 %v333
    %v1091 = vunpack.c.h.b16 %v333
    %v1092 = vunpack.c.l.b16 %v334
    %v1093 = vunpack.c.h.b16 %v334
    %v1094 = vunpack.c.l.b16 %v335
    %v1095 = vunpack.c.h.b16 %v335
    %v1096 = vunpack.c.l.b16 %v336
    %v1097 = vunpack.c.h.b16 %v336
    %v1098 = vunpack.c.l.b16 %v337
    %v1099 = vunpack.c.h.b16 %v337
    %v1100 = vunpack.c.l.b16 %v338
    %v1101 = vunpack.c.h.b16 %v338
    %v1102 = vunpack.c.l.b16 %v339
    %v1103 = vunpack.c.h.b16 %v339
    %v1104 = vunpack.c.l.b16 %v340
    %v1105 = vunpack.c.h.b16 %v340
    %v1106 = vunpack.c.l.b16 %v341
    %v1107 = vunpack.c.h.b16 %v341
    %v1108 = vunpack.c.l.b16 %v342
    %v1109 = vunpack.c.h.b16 %v342
    %v1110 = vunpack.c.l.b16 %v343
    %v1111 = vunpack.c.h.b16 %v343
    %v1112 = vunpack.c.l.b16 %v344
    %v1113 = vunpack.c.h.b16 %v344
    %v1114 = vunpack.c.l.b16 %v345
    %v1115 = vunpack.c.h.b16 %v345
    %v1116 = vunpack.c.l.b16 %v346
    %v1117 = vunpack.c.h.b16 %v346
    %v1118 = vunpack.c.l.b16 %v347
    %v1119 = vunpack.c.h.b16 %v347
    %v1120 = vunpack.c.l.b16 %v348
    %v1121 = vunpack.c.h.b16 %v348
    %v1122 = vunpack.c.l.b16 %v349
    %v1123 = vunpack.c.h.b16 %v349
    %v1124 = vunpack.c.l.b16 %v350
    %v1125 = vunpack.c.h.b16 %v350
    %v1126 = vunpack.c.l.b16 %v351
    %v1127 = vunpack.c.h.b16 %v351
    %v1128 = vunpack.c.l.b16 %v352
    %v1129 = vunpack.c.h.b16 %v352
    %v1130 = vunpack.c.l.b16 %v353
    %v1131 = vunpack.c.h.b16 %v353
    %v1132 = vunpack.c.l.b16 %v354
    %v1133 = vunpack.c.h.b16 %v354
    %v1134 = vunpack.c.l.b16 %v355
    %v1135 = vunpack.c.h.b16 %v355
    %v1136 = vunpack.c.l.b16 %v356
    %v1137 = vunpack.c.h.b16 %v356
    %v1138 = vunpack.c.l.b16 %v357
    %v1139 = vunpack.c.h.b16 %v357
    %v1140 = vunpack.c.l.b16 %v358
    %v1141 = vunpack.c.h.b16 %v358
    %v1142 = vunpack.c.l.b16 %v359
    %v1143 = vunpack.c.h.b16 %v359
    %v1144 = vunpack.c.l.b16 %v360
    %v1145 = vunpack.c.h.b16 %v360
    %v1146 = vunpack.c.l.b16 %v361
    %v1147 = vunpack.c.h.b16 %v361
    %v1148 = vunpack.c.l.b16 %v362
    %v1149 = vunpack.c.h.b16 %v362
    %v1150 = vunpack.c.l.b16 %v363
    %v1151 = vunpack.c.h.b16 %v363
    %v1152 = vunpack.c.l.b16 %v364
    %v1153 = vunpack.c.h.b16 %v364
    %v1154 = vunpack.c.l.b16 %v365
    %v1155 = vunpack.c.h.b16 %v365
    %v1156 = vpack.c.b16 %v648, %v644
    %v1157 = vpack.c.b16 %v649, %v645
    %v1158 = vpack.c.b16 %v650, %v646
    %v1159 = vpack.c.b16 %v651, %v647
    %v1160 = vpack.c.b16 %v656, %v652
    %v1161 = vpack.c.b16 %v657, %v653
    %v1162 = vpack.c.b16 %v658, %v654
    %v1163 = vpack.c.b16 %v659, %v655
    %v1164 = vpack.c.b16 %v664, %v660
    %v1165 = vpack.c.b16 %v665, %v661
    %v1166 = vpack.c.b16 %v666, %v662
    %v1167 = vpack.c.b16 %v667, %v663
    %v1168 = vpack.c.b16 %v672, %v668
    %v1169 = vpack.c.b16 %v673, %v669
    %v1170 = vpack.c.b16 %v674, %v670
    %v1171 = vpack.c.b16 %v675, %v671
    %v1172 = vpack.c.b16 %v680, %v676
    %v1173 = vpack.c.b16 %v681, %v677
    %v1174 = vpack.c.b16 %v682, %v678
    %v1175 = vpack.c.b16 %v683, %v679
    %v1176 = vpack.c.b16 %v688, %v684
    %v1177 = vpack.c.b16 %v689, %v685
    %v1178 = vpack.c.b16 %v690, %v686
    %v1179 = vpack.c.b16 %v691, %v687
    %v1180 = vpack.c.b16 %v696, %v692
    %v1181 = vpack.c.b16 %v697, %v693
    %v1182 = vpack.c.b16 %v698, %v694
    %v1183 = vpack.c.b16 %v699, %v695
    %v1184 = vpack.c.b16 %v704, %v700
    %v1185 = vpack.c.b16 %v705, %v701
    %v1186 = vpack.c.b16 %v706, %v702
    %v1187 = vpack.c.b16 %v707, %v703
    %v1188 = vpack.c.b16 %v712, %v708
    %v1189 = vpack.c.b16 %v713, %v709
    %v1190 = vpack.c.b16 %v714, %v710
    %v1191 = vpack.c.b16 %v715, %v711
    %v1192 = vpack.c.b16 %v720, %v716
    %v1193 = vpack.c.b16 %v721, %v717
    %v1194 = vpack.c.b16 %v722, %v718
    %v1195 = vpack.c.b16 %v723, %v719
    %v1196 = vpack.c.b16 %v728, %v724
    %v1197 = vpack.c.b16 %v729, %v725
    %v1198 = vpack.c.b16 %v730, %v726
    %v1199 = vpack.c.b16 %v731, %v727
    %v1200 = vpack.c.b16 %v736, %v732
    %v1201 = vpack.c.b16 %v737, %v733
    %v1202 = vpack.c.b16 %v738, %v734
    %v1203 = vpack.c.b16 %v739, %v735
    %v1204 = vpack.c.b16 %v744, %v740
    %v1205 = vpack.c.b16 %v745, %v741
    %v1206 = vpack.c.b16 %v746, %v742
    %v1207 = vpack.c.b16 %v747, %v743
    %v1208 = vpack.c.b16 %v752, %v748
    %v1209 = vpack.c.b16 %v753, %v749
    %v1210 = vpack.c.b16 %v754, %v750
    %v1211 = vpack.c.b16 %v755, %v751
    %v1212 = vpack.c.b16 %v760, %v756
    %v1213 = vpack.c.b16 %v761, %v757
    %v1214 = vpack.c.b16 %v762, %v758
    %v1215 = vpack.c.b16 %v763, %v759
    %v1216 = vpack.c.b16 %v768, %v764
    %v1217 = vpack.c.b16 %v769, %v765
    %v1218 = vpack.c.b16 %v770, %v766
    %v1219 = vpack.c.b16 %v771, %v767
    %v1220 = vpack.c.b16 %v776, %v772
    %v1221 = vpack.c.b16 %v777, %v773
    %v1222 = vpack.c.b16 %v778, %v774
    %v1223 = vpack.c.b16 %v779, %v775
    %v1224 = vpack.c.b16 %v784, %v780
    %v1225 = vpack.c.b16 %v785, %v781
    %v1226 = vpack.c.b16 %v786, %v782
    %v1227 = vpack.c.b16 %v787, %v783
    %v1228 = vpack.c.b16 %v792, %v788
    %v1229 = vpack.c.b16 %v793, %v789
    %v1230 = vpack.c.b16 %v794, %v790
    %v1231 = vpack.c.b16 %v795, %v791
    %v1232 = vpack.c.b16 %v800, %v796
    %v1233 = vpack.c.b16 %v801, %v797
    %v1234 = vpack.c.b16 %v802, %v798
    %v1235 = vpack.c.b16 %v803, %v799
    %v1236 = vpack.c.b16 %v808, %v804
    %v1237 = vpack.c.b16 %v809, %v805
    %v1238 = vpack.c.b16 %v810, %v806
    %v1239 = vpack.c.b16 %v811, %v807
    %v1240 = vpack.c.b16 %v816, %v812
    %v1241 = vpack.c.b16 %v817, %v813
    %v1242 = vpack.c.b16 %v818, %v814
    %v1243 = vpack.c.b16 %v819, %v815
    %v1244 = vpack.c.b16 %v824, %v820
    %v1245 = vpack.c.b16 %v825, %v821
    %v1246 = vpack.c.b16 %v826, %v822
    %v1247 = vpack.c.b16 %v827, %v823
    %v1248 = vpack.c.b16 %v832, %v828
    %v1249 = vpack.c.b16 %v833, %v829
    %v1250 = vpack.c.b16 %v834, %v830
    %v1251 = vpack.c.b16 %v835, %v831
    %v1252 = vpack.c.b16 %v840, %v836
    %v1253 = vpack.c.b16 %v841, %v837
    %v1254 = vpack.c.b16 %v842, %v838
    %v1255 = vpack.c.b16 %v843, %v839
    %v1256 = vpack.c.b16 %v848, %v844
    %v1257 = vpack.c.b16 %v849, %v845
    %v1258 = vpack.c.b16 %v850, %v846
    %v1259 = vpack.c.b16 %v851, %v847
    %v1260 = vpack.c.b16 %v856, %v852
    %v1261 = vpack.c.b16 %v857, %v853
    %v1262 = vpack.c.b16 %v858, %v854
    %v1263 = vpack.c.b16 %v859, %v855
    %v1264 = vpack.c.b16 %v864, %v860
    %v1265 = vpack.c.b16 %v865, %v861
    %v1266 = vpack.c.b16 %v866, %v862
    %v1267 = vpack.c.b16 %v867, %v863
    %v1268 = vpack.c.b16 %v872, %v868
    %v1269 = vpack.c.b16 %v873, %v869
    %v1270 = vpack.c.b16 %v874, %v870
    %v1271 = vpack.c.b16 %v875, %v871
    %v1272 = vpack.c.b16 %v880, %v876
    %v1273 = vpack.c.b16 %v881, %v877
    %v1274 = vpack.c.b16 %v882, %v878
    %v1275 = vpack.c.b16 %v883, %v879
    %v1276 = vpack.c.b16 %v888, %v884
    %v1277 = vpack.c.b16 %v889, %v885
    %v1278 = vpack.c.b16 %v890, %v886
    %v1279 = vpack.c.b16 %v891, %v887
    %v1280 = vpack.c.b16 %v896, %v892
    %v1281 = vpack.c.b16 %v897, %v893
    %v1282 = vpack.c.b16 %v898, %v894
    %v1283 = vpack.c.b16 %v899, %v895
    %v1284 = vpack.c.b16 %v904, %v900
    %v1285 = vpack.c.b16 %v905, %v901
    %v1286 = vpack.c.b16 %v906, %v902
    %v1287 = vpack.c.b16 %v907, %v903
    %v1288 = vpack.c.b16 %v912, %v908
    %v1289 = vpack.c.b16 %v913, %v909
    %v1290 = vpack.c.b16 %v914, %v910
    %v1291 = vpack.c.b16 %v915, %v911
    %v1292 = vpack.c.b16 %v920, %v916
    %v1293 = vpack.c.b16 %v921, %v917
    %v1294 = vpack.c.b16 %v922, %v918
    %v1295 = vpack.c.b16 %v923, %v919
    %v1296 = vpack.c.b16 %v928, %v924
    %v1297 = vpack.c.b16 %v929, %v925
    %v1298 = vpack.c.b16 %v930, %v926
    %v1299 = vpack.c.b16 %v931, %v927
    %v1300 = vpack.c.b16 %v936, %v932
    %v1301 = vpack.c.b16 %v937, %v933
    %v1302 = vpack.c.b16 %v938, %v934
    %v1303 = vpack.c.b16 %v939, %v935
    %v1304 = vpack.c.b16 %v944, %v940
    %v1305 = vpack.c.b16 %v945, %v941
    %v1306 = vpack.c.b16 %v946, %v942
    %v1307 = vpack.c.b16 %v947, %v943
    %v1308 = vpack.c.b16 %v952, %v948
    %v1309 = vpack.c.b16 %v953, %v949
    %v1310 = vpack.c.b16 %v954, %v950
    %v1311 = vpack.c.b16 %v955, %v951
    %v1312 = vpack.c.b16 %v960, %v956
    %v1313 = vpack.c.b16 %v961, %v957
    %v1314 = vpack.c.b16 %v962, %v958
    %v1315 = vpack.c.b16 %v963, %v959
    %v1316 = vpack.c.b16 %v968, %v964
    %v1317 = vpack.c.b16 %v969, %v965
    %v1318 = vpack.c.b16 %v970, %v966
    %v1319 = vpack.c.b16 %v971, %v967
    %v1320 = vpack.c.b16 %v976, %v972
    %v1321 = vpack.c.b16 %v977, %v973
    %v1322 = vpack.c.b16 %v978, %v974
    %v1323 = vpack.c.b16 %v979, %v975
    %v1324 = vpack.c.b16 %v984, %v980
    %v1325 = vpack.c.b16 %v985, %v981
    %v1326 = vpack.c.b16 %v986, %v982
    %v1327 = vpack.c.b16 %v987, %v983
    %v1328 = vpack.c.b16 %v992, %v988
    %v1329 = vpack.c.b16 %v993, %v989
    %v1330 = vpack.c.b16 %v994, %v990
    %v1331 = vpack.c.b16 %v995, %v991
    %v1332 = vpack.c.b16 %v1000, %v996
    %v1333 = vpack.c.b16 %v1001, %v997
    %v1334 = vpack.c.b16 %v1002, %v998
    %v1335 = vpack.c.b16 %v1003, %v999
    %v1336 = vpack.c.b16 %v1008, %v1004
    %v1337 = vpack.c.b16 %v1009, %v1005
    %v1338 = vpack.c.b16 %v1010, %v1006
    %v1339 = vpack.c.b16 %v1011, %v1007
    %v1340 = vpack.c.b16 %v1016, %v1012
    %v1341 = vpack.c.b16 %v1017, %v1013
    %v1342 = vpack.c.b16 %v1018, %v1014
    %v1343 = vpack.c.b16 %v1019, %v1015
    %v1344 = vpack.c.b16 %v1024, %v1020
    %v1345 = vpack.c.b16 %v1025, %v1021
    %v1346 = vpack.c.b16 %v1026, %v1022
    %v1347 = vpack.c.b16 %v1027, %v1023
    %v1348 = vpack.c.b16 %v1032, %v1028
    %v1349 = vpack.c.b16 %v1033, %v1029
    %v1350 = vpack.c.b16 %v1034, %v1030
    %v1351 = vpack.c.b16 %v1035, %v1031
    %v1352 = vpack.c.b16 %v1040, %v1036
    %v1353 = vpack.c.b16 %v1041, %v1037
    %v1354 = vpack.c.b16 %v1042, %v1038
    %v1355 = vpack.c.b16 %v1043, %v1039
    %v1356 = vpack.c.b16 %v1048, %v1044
    %v1357 = vpack.c.b16 %v1049, %v1045
    %v1358 = vpack.c.b16 %v1050, %v1046
    %v1359 = vpack.c.b16 %v1051, %v1047
    %v1360 = vpack.c.b16 %v1056, %v1052
    %v1361 = vpack.c.b16 %v1057, %v1053
    %v1362 = vpack.c.b16 %v1058, %v1054
    %v1363 = vpack.c.b16 %v1059, %v1055
    %v1364 = vpack.c.b16 %v1064, %v1060
    %v1365 = vpack.c.b16 %v1065, %v1061
    %v1366 = vpack.c.b16 %v1066, %v1062
    %v1367 = vpack.c.b16 %v1067, %v1063
    %v1368 = vpack.c.b16 %v1072, %v1068
    %v1369 = vpack.c.b16 %v1073, %v1069
    %v1370 = vpack.c.b16 %v1074, %v1070
    %v1371 = vpack.c.b16 %v1075, %v1071
    %v1372 = vpack.c.b16 %v1080, %v1076
    %v1373 = vpack.c.b16 %v1081, %v1077
    %v1374 = vpack.c.b16 %v1082, %v1078
    %v1375 = vpack.c.b16 %v1083, %v1079
    %v1376 = vpack.c.b16 %v1088, %v1084
    %v1377 = vpack.c.b16 %v1089, %v1085
    %v1378 = vpack.c.b16 %v1090, %v1086
    %v1379 = vpack.c.b16 %v1091, %v1087
    %v1380 = vpack.c.b16 %v1096, %v1092
    %v1381 = vpack.c.b16 %v1097, %v1093
    %v1382 = vpack.c.b16 %v1098, %v1094
    %v1383 = vpack.c.b16 %v1099, %v1095
    %v1384 = vpack.c.b16 %v1104, %v1100
    %v1385 = vpack.c.b16 %v1105, %v1101
    %v1386 = vpack.c.b16 %v1106, %v1102
    %v1387 = vpack.c.b16 %v1107, %v1103
    %v1388 = vpack.c.b16 %v1112, %v1108
    %v1389 = vpack.c.b16 %v1113, %v1109
    %v1390 = vpack.c.b16 %v1114, %v1110
    %v1391 = vpack.c.b16 %v1115, %v1111
    %v1392 = vpack.c.b16 %v1120, %v1116
    %v1393 = vpack.c.b16 %v1121, %v1117
    %v1394 = vpack.c.b16 %v1122, %v1118
    %v1395 = vpack.c.b16 %v1123, %v1119
    %v1396 = vpack.c.b16 %v1128, %v1124
    %v1397 = vpack.c.b16 %v1129, %v1125
    %v1398 = vpack.c.b16 %v1130, %v1126
    %v1399 = vpack.c.b16 %v1131, %v1127
    %v1400 = vpack.c.b16 %v1136, %v1132
    %v1401 = vpack.c.b16 %v1137, %v1133
    %v1402 = vpack.c.b16 %v1138, %v1134
    %v1403 = vpack.c.b16 %v1139, %v1135
    %v1404 = vpack.c.b16 %v1144, %v1140
    %v1405 = vpack.c.b16 %v1145, %v1141
    %v1406 = vpack.c.b16 %v1146, %v1142
    %v1407 = vpack.c.b16 %v1147, %v1143
    %v1408 = vpack.c.b16 %v1152, %v1148
    %v1409 = vpack.c.b16 %v1153, %v1149
    %v1410 = vpack.c.b16 %v1154, %v1150
    %v1411 = vpack.c.b16 %v1155, %v1151
    %1668 = vmatprep.subr.bf16.mxu0 %v1157
    %1669 = vmatpush1.bf16.msra.mxu0 %v1156
    %1670 = vmatprep.subr.bf16.mxu0 %v1161
    %1671 = vmatpush1.bf16.msra.mxu0 %v1160
    %1672 = vmatprep.subr.bf16.mxu0 %v1165
    %1673 = vmatpush1.bf16.msra.mxu0 %v1164
    %1674 = vmatprep.subr.bf16.mxu0 %v1169
    %1675 = vmatpush1.bf16.msra.mxu0 %v1168
    %1676 = vmatprep.subr.bf16.mxu0 %v1173
    %1677 = vmatpush1.bf16.msra.mxu0 %v1172
    %1678 = vmatprep.subr.bf16.mxu0 %v1177
    %1679 = vmatpush1.bf16.msra.mxu0 %v1176
    %1680 = vmatprep.subr.bf16.mxu0 %v1181
    %1681 = vmatpush1.bf16.msra.mxu0 %v1180
    %1682 = vmatprep.subr.bf16.mxu0 %v1185
    %1683 = vmatpush1.bf16.msra.mxu0 %v1184
    %1684 = vmatprep.subr.bf16.mxu0 %v1189
    %1685 = vmatpush1.bf16.msra.mxu0 %v1188
    %1686 = vmatprep.subr.bf16.mxu0 %v1193
    %1687 = vmatpush1.bf16.msra.mxu0 %v1192
    %1688 = vmatprep.subr.bf16.mxu0 %v1197
    %1689 = vmatpush1.bf16.msra.mxu0 %v1196
    %1690 = vmatprep.subr.bf16.mxu0 %v1201
    %1691 = vmatpush1.bf16.msra.mxu0 %v1200
    %1692 = vmatprep.subr.bf16.mxu0 %v1205
    %1693 = vmatpush1.bf16.msra.mxu0 %v1204
    %1694 = vmatprep.subr.bf16.mxu0 %v1209
    %1695 = vmatpush1.bf16.msra.mxu0 %v1208
    %1696 = vmatprep.subr.bf16.mxu0 %v1213
    %1697 = vmatpush1.bf16.msra.mxu0 %v1212
    %1698 = vmatprep.subr.bf16.mxu0 %v1217
    %1699 = vmatpush1.bf16.msra.mxu0 %v1216
    %1700 = vmatprep.mubr.bf16.mxu0 %v103
    %1701 = vmatmul.mubr.bf16.gmra.mrb[0].mxu0 %v102
    %v1702 = vpop.f32.mrb[0].mxu0
    %v1703 = vadd.f32 %v371, %v1702
    %v1704 = vpop.f32.mrb[0].mxu0
    %v1705 = vadd.f32 %v375, %v1704
    %v1706 = vpop.f32.mrb[0].mxu0
    %v1707 = vpop.f32.mrb[0].mxu0
    %1708 = vdwg.mxu0
    %1709 = vmatprep.subr.bf16.mxu0 %v1221
    %1710 = vmatpush1.bf16.msra.mxu0 %v1220
    %1711 = vmatprep.subr.bf16.mxu0 %v1225
    %1712 = vmatpush1.bf16.msra.mxu0 %v1224
    %1713 = vmatprep.subr.bf16.mxu0 %v1229
    %1714 = vmatpush1.bf16.msra.mxu0 %v1228
    %1715 = vmatprep.subr.bf16.mxu0 %v1233
    %1716 = vmatpush1.bf16.msra.mxu0 %v1232
    %1717 = vmatprep.subr.bf16.mxu0 %v1237
    %1718 = vmatpush1.bf16.msra.mxu0 %v1236
    %1719 = vmatprep.subr.bf16.mxu0 %v1241
    %1720 = vmatpush1.bf16.msra.mxu0 %v1240
    %1721 = vmatprep.subr.bf16.mxu0 %v1245
    %1722 = vmatpush1.bf16.msra.mxu0 %v1244
    %1723 = vmatprep.subr.bf16.mxu0 %v1249
    %1724 = vmatpush1.bf16.msra.mxu0 %v1248
    %1725 = vmatprep.subr.bf16.mxu0 %v1253
    %1726 = vmatpush1.bf16.msra.mxu0 %v1252
    %1727 = vmatprep.subr.bf16.mxu0 %v1257
    %1728 = vmatpush1.bf16.msra.mxu0 %v1256
    %1729 = vmatprep.subr.bf16.mxu0 %v1261
    %1730 = vmatpush1.bf16.msra.mxu0 %v1260
    %1731 = vmatprep.subr.bf16.mxu0 %v1265
    %1732 = vmatpush1.bf16.msra.mxu0 %v1264
    %1733 = vmatprep.subr.bf16.mxu0 %v1269
    %1734 = vmatpush1.bf16.msra.mxu0 %v1268
    %1735 = vmatprep.subr.bf16.mxu0 %v1273
    %1736 = vmatpush1.bf16.msra.mxu0 %v1272
    %1737 = vmatprep.subr.bf16.mxu0 %v1277
    %1738 = vmatpush1.bf16.msra.mxu0 %v1276
    %1739 = vmatprep.subr.bf16.mxu0 %v1281
    %1740 = vmatpush1.bf16.msra.mxu0 %v1280
    %1741 = vmatprep.mubr.bf16.mxu0 %v105
    %1742 = vmatmul.mubr.bf16.gmra.mrb[0].mxu0 %v104
    %v1743 = vpop.f32.mrb[0].mxu0
    %v1744 = vadd.f32 %v1703, %v1743
    %v1745 = vpop.f32.mrb[0].mxu0
    %v1746 = vadd.f32 %v1705, %v1745
    %v1747 = vpop.f32.mrb[0].mxu0
    %v1748 = vpop.f32.mrb[0].mxu0
    %1749 = vdwg.mxu0
    %1750 = vmatprep.subr.bf16.mxu0 %v1285
    %1751 = vmatpush1.bf16.msra.mxu0 %v1284
    %1752 = vmatprep.subr.bf16.mxu0 %v1289
    %1753 = vmatpush1.bf16.msra.mxu0 %v1288
    %1754 = vmatprep.subr.bf16.mxu0 %v1293
    %1755 = vmatpush1.bf16.msra.mxu0 %v1292
    %1756 = vmatprep.subr.bf16.mxu0 %v1297
    %1757 = vmatpush1.bf16.msra.mxu0 %v1296
    %1758 = vmatprep.subr.bf16.mxu0 %v1301
    %1759 = vmatpush1.bf16.msra.mxu0 %v1300
    %1760 = vmatprep.subr.bf16.mxu0 %v1305
    %1761 = vmatpush1.bf16.msra.mxu0 %v1304
    %1762 = vmatprep.subr.bf16.mxu0 %v1309
    %1763 = vmatpush1.bf16.msra.mxu0 %v1308
    %1764 = vmatprep.subr.bf16.mxu0 %v1313
    %1765 = vmatpush1.bf16.msra.mxu0 %v1312
    %1766 = vmatprep.subr.bf16.mxu0 %v1317
    %1767 = vmatpush1.bf16.msra.mxu0 %v1316
    %1768 = vmatprep.subr.bf16.mxu0 %v1321
    %1769 = vmatpush1.bf16.msra.mxu0 %v1320
    %1770 = vmatprep.subr.bf16.mxu0 %v1325
    %1771 = vmatpush1.bf16.msra.mxu0 %v1324
    %1772 = vmatprep.subr.bf16.mxu0 %v1329
    %1773 = vmatpush1.bf16.msra.mxu0 %v1328
    %1774 = vmatprep.subr.bf16.mxu0 %v1333
    %1775 = vmatpush1.bf16.msra.mxu0 %v1332
    %1776 = vmatprep.subr.bf16.mxu0 %v1337
    %1777 = vmatpush1.bf16.msra.mxu0 %v1336
    %1778 = vmatprep.subr.bf16.mxu0 %v1341
    %1779 = vmatpush1.bf16.msra.mxu0 %v1340
    %1780 = vmatprep.subr.bf16.mxu0 %v1345
    %1781 = vmatpush1.bf16.msra.mxu0 %v1344
    %1782 = vmatprep.mubr.bf16.mxu0 %v107
    %1783 = vmatmul.mubr.bf16.gmra.mrb[0].mxu0 %v106
    %v1784 = vpop.f32.mrb[0].mxu0
    %v1785 = vadd.f32 %v1744, %v1784
    %v1786 = vpop.f32.mrb[0].mxu0
    %v1787 = vadd.f32 %v1746, %v1786
    %v1788 = vpop.f32.mrb[0].mxu0
    %v1789 = vpop.f32.mrb[0].mxu0
    %1790 = vdwg.mxu0
    %1791 = vmatprep.subr.bf16.mxu0 %v1349
    %1792 = vmatpush1.bf16.msra.mxu0 %v1348
    %1793 = vmatprep.subr.bf16.mxu0 %v1353
    %1794 = vmatpush1.bf16.msra.mxu0 %v1352
    %1795 = vmatprep.subr.bf16.mxu0 %v1357
    %1796 = vmatpush1.bf16.msra.mxu0 %v1356
    %1797 = vmatprep.subr.bf16.mxu0 %v1361
    %1798 = vmatpush1.bf16.msra.mxu0 %v1360
    %1799 = vmatprep.subr.bf16.mxu0 %v1365
    %1800 = vmatpush1.bf16.msra.mxu0 %v1364
    %1801 = vmatprep.subr.bf16.mxu0 %v1369
    %1802 = vmatpush1.bf16.msra.mxu0 %v1368
    %1803 = vmatprep.subr.bf16.mxu0 %v1373
    %1804 = vmatpush1.bf16.msra.mxu0 %v1372
    %1805 = vmatprep.subr.bf16.mxu0 %v1377
    %1806 = vmatpush1.bf16.msra.mxu0 %v1376
    %1807 = vmatprep.subr.bf16.mxu0 %v1381
    %1808 = vmatpush1.bf16.msra.mxu0 %v1380
    %1809 = vmatprep.subr.bf16.mxu0 %v1385
    %1810 = vmatpush1.bf16.msra.mxu0 %v1384
    %1811 = vmatprep.subr.bf16.mxu0 %v1389
    %1812 = vmatpush1.bf16.msra.mxu0 %v1388
    %1813 = vmatprep.subr.bf16.mxu0 %v1393
    %1814 = vmatpush1.bf16.msra.mxu0 %v1392
    %1815 = vmatprep.subr.bf16.mxu0 %v1397
    %1816 = vmatpush1.bf16.msra.mxu0 %v1396
    %1817 = vmatprep.subr.bf16.mxu0 %v1401
    %1818 = vmatpush1.bf16.msra.mxu0 %v1400
    %1819 = vmatprep.subr.bf16.mxu0 %v1405
    %1820 = vmatpush1.bf16.msra.mxu0 %v1404
    %1821 = vmatprep.subr.bf16.mxu0 %v1409
    %1822 = vmatpush1.bf16.msra.mxu0 %v1408
    %1823 = vmatprep.mubr.bf16.mxu0 %v109
    %1824 = vmatmul.mubr.bf16.gmra.mrb[0].mxu0 %v108
    %v1825 = vpop.f32.mrb[0].mxu0
    %v1826 = vadd.f32 %v1785, %v1825
    %v1827 = vpop.f32.mrb[0].mxu0
    %v1828 = vadd.f32 %v1787, %v1827
    %v1829 = vpop.f32.mrb[0].mxu0
    %v1830 = vpop.f32.mrb[0].mxu0
    %1831 = vdwg.mxu0
    %1832 = vmatprep.subr.bf16.mxu0 %v1159
    %1833 = vmatpush1.bf16.msra.mxu0 %v1158
    %1834 = vmatprep.subr.bf16.mxu0 %v1163
    %1835 = vmatpush1.bf16.msra.mxu0 %v1162
    %1836 = vmatprep.subr.bf16.mxu0 %v1167
    %1837 = vmatpush1.bf16.msra.mxu0 %v1166
    %1838 = vmatprep.subr.bf16.mxu0 %v1171
    %1839 = vmatpush1.bf16.msra.mxu0 %v1170
    %1840 = vmatprep.subr.bf16.mxu0 %v1175
    %1841 = vmatpush1.bf16.msra.mxu0 %v1174
    %1842 = vmatprep.subr.bf16.mxu0 %v1179
    %1843 = vmatpush1.bf16.msra.mxu0 %v1178
    %1844 = vmatprep.subr.bf16.mxu0 %v1183
    %1845 = vmatpush1.bf16.msra.mxu0 %v1182
    %1846 = vmatprep.subr.bf16.mxu0 %v1187
    %1847 = vmatpush1.bf16.msra.mxu0 %v1186
    %1848 = vmatprep.subr.bf16.mxu0 %v1191
    %1849 = vmatpush1.bf16.msra.mxu0 %v1190
    %1850 = vmatprep.subr.bf16.mxu0 %v1195
    %1851 = vmatpush1.bf16.msra.mxu0 %v1194
    %1852 = vmatprep.subr.bf16.mxu0 %v1199
    %1853 = vmatpush1.bf16.msra.mxu0 %v1198
    %1854 = vmatprep.subr.bf16.mxu0 %v1203
    %1855 = vmatpush1.bf16.msra.mxu0 %v1202
    %1856 = vmatprep.subr.bf16.mxu0 %v1207
    %1857 = vmatpush1.bf16.msra.mxu0 %v1206
    %1858 = vmatprep.subr.bf16.mxu0 %v1211
    %1859 = vmatpush1.bf16.msra.mxu0 %v1210
    %1860 = vmatprep.subr.bf16.mxu0 %v1215
    %1861 = vmatpush1.bf16.msra.mxu0 %v1214
    %1862 = vmatprep.subr.bf16.mxu0 %v1219
    %1863 = vmatpush1.bf16.msra.mxu0 %v1218
    %1864 = vmatprep.mubr.bf16.mxu0 %v103
    %1865 = vmatmul.mubr.bf16.gmra.mrb[0].mxu0 %v102
    %v1866 = vpop.f32.mrb[0].mxu0
    %v1867 = vadd.f32 %v379, %v1866
    %v1868 = vpop.f32.mrb[0].mxu0
    %v1869 = vadd.f32 %v383, %v1868
    %v1870 = vpop.f32.mrb[0].mxu0
    %v1871 = vpop.f32.mrb[0].mxu0
    %1872 = vdwg.mxu0
    %1873 = vmatprep.subr.bf16.mxu0 %v1223
    %1874 = vmatpush1.bf16.msra.mxu0 %v1222
    %1875 = vmatprep.subr.bf16.mxu0 %v1227
    %1876 = vmatpush1.bf16.msra.mxu0 %v1226
    %1877 = vmatprep.subr.bf16.mxu0 %v1231
    %1878 = vmatpush1.bf16.msra.mxu0 %v1230
    %1879 = vmatprep.subr.bf16.mxu0 %v1235
    %1880 = vmatpush1.bf16.msra.mxu0 %v1234
    %1881 = vmatprep.subr.bf16.mxu0 %v1239
    %1882 = vmatpush1.bf16.msra.mxu0 %v1238
    %1883 = vmatprep.subr.bf16.mxu0 %v1243
    %1884 = vmatpush1.bf16.msra.mxu0 %v1242
    %1885 = vmatprep.subr.bf16.mxu0 %v1247
    %1886 = vmatpush1.bf16.msra.mxu0 %v1246
    %1887 = vmatprep.subr.bf16.mxu0 %v1251
    %1888 = vmatpush1.bf16.msra.mxu0 %v1250
    %1889 = vmatprep.subr.bf16.mxu0 %v1255
    %1890 = vmatpush1.bf16.msra.mxu0 %v1254
    %1891 = vmatprep.subr.bf16.mxu0 %v1259
    %1892 = vmatpush1.bf16.msra.mxu0 %v1258
    %1893 = vmatprep.subr.bf16.mxu0 %v1263
    %1894 = vmatpush1.bf16.msra.mxu0 %v1262
    %1895 = vmatprep.subr.bf16.mxu0 %v1267
    %1896 = vmatpush1.bf16.msra.mxu0 %v1266
    %1897 = vmatprep.subr.bf16.mxu0 %v1271
    %1898 = vmatpush1.bf16.msra.mxu0 %v1270
    %1899 = vmatprep.subr.bf16.mxu0 %v1275
    %1900 = vmatpush1.bf16.msra.mxu0 %v1274
    %1901 = vmatprep.subr.bf16.mxu0 %v1279
    %1902 = vmatpush1.bf16.msra.mxu0 %v1278
    %1903 = vmatprep.subr.bf16.mxu0 %v1283
    %1904 = vmatpush1.bf16.msra.mxu0 %v1282
    %1905 = vmatprep.mubr.bf16.mxu0 %v105
    %1906 = vmatmul.mubr.bf16.gmra.mrb[0].mxu0 %v104
    %v1907 = vpop.f32.mrb[0].mxu0
    %v1908 = vadd.f32 %v1867, %v1907
    %v1909 = vpop.f32.mrb[0].mxu0
    %v1910 = vadd.f32 %v1869, %v1909
    %v1911 = vpop.f32.mrb[0].mxu0
    %v1912 = vpop.f32.mrb[0].mxu0
    %1913 = vdwg.mxu0
    %1914 = vmatprep.subr.bf16.mxu0 %v1287
    %1915 = vmatpush1.bf16.msra.mxu0 %v1286
    %1916 = vmatprep.subr.bf16.mxu0 %v1291
    %1917 = vmatpush1.bf16.msra.mxu0 %v1290
    %1918 = vmatprep.subr.bf16.mxu0 %v1295
    %1919 = vmatpush1.bf16.msra.mxu0 %v1294
    %1920 = vmatprep.subr.bf16.mxu0 %v1299
    %1921 = vmatpush1.bf16.msra.mxu0 %v1298
    %1922 = vmatprep.subr.bf16.mxu0 %v1303
    %1923 = vmatpush1.bf16.msra.mxu0 %v1302
    %1924 = vmatprep.subr.bf16.mxu0 %v1307
    %1925 = vmatpush1.bf16.msra.mxu0 %v1306
    %1926 = vmatprep.subr.bf16.mxu0 %v1311
    %1927 = vmatpush1.bf16.msra.mxu0 %v1310
    %1928 = vmatprep.subr.bf16.mxu0 %v1315
    %1929 = vmatpush1.bf16.msra.mxu0 %v1314
    %1930 = vmatprep.subr.bf16.mxu0 %v1319
    %1931 = vmatpush1.bf16.msra.mxu0 %v1318
    %1932 = vmatprep.subr.bf16.mxu0 %v1323
    %1933 = vmatpush1.bf16.msra.mxu0 %v1322
    %1934 = vmatprep.subr.bf16.mxu0 %v1327
    %1935 = vmatpush1.bf16.msra.mxu0 %v1326
    %1936 = vmatprep.subr.bf16.mxu0 %v1331
    %1937 = vmatpush1.bf16.msra.mxu0 %v1330
    %1938 = vmatprep.subr.bf16.mxu0 %v1335
    %1939 = vmatpush1.bf16.msra.mxu0 %v1334
    %1940 = vmatprep.subr.bf16.mxu0 %v1339
    %1941 = vmatpush1.bf16.msra.mxu0 %v1338
    %1942 = vmatprep.subr.bf16.mxu0 %v1343
    %1943 = vmatpush1.bf16.msra.mxu0 %v1342
    %1944 = vmatprep.subr.bf16.mxu0 %v1347
    %1945 = vmatpush1.bf16.msra.mxu0 %v1346
    %1946 = vmatprep.mubr.bf16.mxu0 %v107
    %1947 = vmatmul.mubr.bf16.gmra.mrb[0].mxu0 %v106
    %v1948 = vpop.f32.mrb[0].mxu0
    %v1949 = vadd.f32 %v1908, %v1948
    %v1950 = vpop.f32.mrb[0].mxu0
    %v1951 = vadd.f32 %v1910, %v1950
    %v1952 = vpop.f32.mrb[0].mxu0
    %v1953 = vpop.f32.mrb[0].mxu0
    %1954 = vdwg.mxu0
    %1955 = vmatprep.subr.bf16.mxu0 %v1351
    %1956 = vmatpush1.bf16.msra.mxu0 %v1350
    %1957 = vmatprep.subr.bf16.mxu0 %v1355
    %1958 = vmatpush1.bf16.msra.mxu0 %v1354
    %1959 = vmatprep.subr.bf16.mxu0 %v1359
    %1960 = vmatpush1.bf16.msra.mxu0 %v1358
    %1961 = vmatprep.subr.bf16.mxu0 %v1363
    %1962 = vmatpush1.bf16.msra.mxu0 %v1362
    %1963 = vmatprep.subr.bf16.mxu0 %v1367
    %1964 = vmatpush1.bf16.msra.mxu0 %v1366
    %1965 = vmatprep.subr.bf16.mxu0 %v1371
    %1966 = vmatpush1.bf16.msra.mxu0 %v1370
    %1967 = vmatprep.subr.bf16.mxu0 %v1375
    %1968 = vmatpush1.bf16.msra.mxu0 %v1374
    %1969 = vmatprep.subr.bf16.mxu0 %v1379
    %1970 = vmatpush1.bf16.msra.mxu0 %v1378
    %1971 = vmatprep.subr.bf16.mxu0 %v1383
    %1972 = vmatpush1.bf16.msra.mxu0 %v1382
    %1973 = vmatprep.subr.bf16.mxu0 %v1387
    %1974 = vmatpush1.bf16.msra.mxu0 %v1386
    %1975 = vmatprep.subr.bf16.mxu0 %v1391
    %1976 = vmatpush1.bf16.msra.mxu0 %v1390
    %1977 = vmatprep.subr.bf16.mxu0 %v1395
    %1978 = vmatpush1.bf16.msra.mxu0 %v1394
    %1979 = vmatprep.subr.bf16.mxu0 %v1399
    %1980 = vmatpush1.bf16.msra.mxu0 %v1398
    %1981 = vmatprep.subr.bf16.mxu0 %v1403
    %1982 = vmatpush1.bf16.msra.mxu0 %v1402
    %1983 = vmatprep.subr.bf16.mxu0 %v1407
    %1984 = vmatpush1.bf16.msra.mxu0 %v1406
    %1985 = vmatprep.subr.bf16.mxu0 %v1411
    %1986 = vmatpush1.bf16.msra.mxu0 %v1410
    %1987 = vmatprep.mubr.bf16.mxu0 %v109
    %1988 = vmatmul.mubr.bf16.gmra.mrb[0].mxu0 %v108
    %v1989 = vpop.f32.mrb[0].mxu0
    %v1990 = vadd.f32 %v1949, %v1989
    %v1991 = vpop.f32.mrb[0].mxu0
    %v1992 = vadd.f32 %v1951, %v1991
    %v1993 = vpop.f32.mrb[0].mxu0
    %v1994 = vpop.f32.mrb[0].mxu0
    %1995 = vdwg.mxu0
    %vm1996 = vcmp.gt.f32.partialorder %v1826, 0.0
    %vm1997 = vcmp.gt.f32.partialorder %v1828, 0.0
    %vm1998 = vcmp.gt.f32.partialorder %v1990, 0.0
    %vm1999 = vcmp.gt.f32.partialorder %v1992, 0.0
    %v2000 = vmul.f32 %v1826, 0.2
    %v2001 = vmul.f32 %v1828, 0.2
    %v2002 = vmul.f32 %v1990, 0.2
    %v2003 = vmul.f32 %v1992, 0.2
    %v2004 = vsel %vm1996, %v1826, %v2000
    %v2005 = vsel %vm1997, %v1828, %v2001
    %v2006 = vsel %vm1998, %v1990, %v2002
    %v2007 = vsel %vm1999, %v1992, %v2003
    %v2008 = vld [vmem:[%s5] sm:$0xf]
    %v2009 = vmul.f32 %v2006, 0.5
    %v2010 = vmul.f32 %v2007, 0.5
    %v2011 = vmul.f32 %v2009, 1.442695
    %v2012 = vpow.pop %v2011
    %v2013 = vmul.f32 %v2010, 1.442695
    %v2014 = vpow.pop %v2013
    %v2017 = vcombine.low %v2012, %v2014
    %v2019 = vunpack.c.l.s4 1983009808
    %v2020 = vunpack.c.0.s8 %v2019
    %v2021 = vlaneseq
    %v2022 = vshrl.u32 %v2021, 7
    %v2023 = vsub.s32 %v2020, %v2022
    %v2024 = vrot.slane %v2017, %v2023
    %v2026 = vmul.f32 %v2008, %v2024
    %v2029 = vcombine.low %v2004, %v2005
    %v2031 = vunpack.c.l.s4 1983009808
    %v2032 = vunpack.c.0.s8 %v2031
    %v2033 = vlaneseq
    %v2034 = vshrl.u32 %v2033, 7
    %v2035 = vsub.s32 %v2032, %v2034
    %v2036 = vrot.slane %v2029, %v2035
    %v2038 = vadd.f32 %v2026, %v2036
    %v2041 = vunpack.c.l.s4 1983009808
    %v2042 = vunpack.c.0.s8 %v2041
    %v2043 = vlaneseq
    %v2044 = vshrl.u32 %v2043, 7
    %v2045 = vsub.s32 %v2042, %v2044
    %v2046 = vrot.slane %v2038, %v2045
    %v2047 = vcombine.high %v2046, %v2046
    %v2050 = vpack.c.bf16 %v2046, %v2046
    %v2051 = vpack.c.bf16 %v2047, %v2047
    %v2052 = vld [vmem:[#allocation5] sm:$0xff]
    %v2053 = vld [vmem:[#allocation5 + $0x8] sm:$0xff]
    %v2054 = vld [vmem:[#allocation5 + $0x10] sm:$0xff]
    %v2055 = vld [vmem:[#allocation5 + $0x18] sm:$0xff]
    %v2056 = vld [vmem:[#allocation5 + $0x20] sm:$0xff]
    %v2057 = vld [vmem:[#allocation5 + $0x28] sm:$0xff]
    %v2058 = vld [vmem:[#allocation5 + $0x30] sm:$0xff]
    %v2059 = vld [vmem:[#allocation5 + $0x38] sm:$0xff]
    %v2060 = vld [vmem:[#allocation5 + $0x40] sm:$0xff]
    %v2061 = vld [vmem:[#allocation5 + $0x48] sm:$0xff]
    %v2062 = vld [vmem:[#allocation5 + $0x50] sm:$0xff]
    %v2063 = vld [vmem:[#allocation5 + $0x58] sm:$0xff]
    %v2064 = vld [vmem:[#allocation5 + $0x60] sm:$0xff]
    %v2065 = vld [vmem:[#allocation5 + $0x68] sm:$0xff]
    %v2066 = vld [vmem:[#allocation5 + $0x70] sm:$0xff]
    %v2067 = vld [vmem:[#allocation5 + $0x78] sm:$0xff]
    %v2068 = vld [vmem:[#allocation5 + $0x80] sm:$0xff]
    %v2069 = vld [vmem:[#allocation5 + $0x88] sm:$0xff]
    %v2070 = vld [vmem:[#allocation5 + $0x90] sm:$0xff]
    %v2071 = vld [vmem:[#allocation5 + $0x98] sm:$0xff]
    %v2072 = vld [vmem:[#allocation5 + $0xa0] sm:$0xff]
    %v2073 = vld [vmem:[#allocation5 + $0xa8] sm:$0xff]
    %v2074 = vld [vmem:[#allocation5 + $0xb0] sm:$0xff]
    %v2075 = vld [vmem:[#allocation5 + $0xb8] sm:$0xff]
    %v2076 = vld [vmem:[#allocation5 + $0xc0] sm:$0xff]
    %v2077 = vld [vmem:[#allocation5 + $0xc8] sm:$0xff]
    %v2078 = vld [vmem:[#allocation5 + $0xd0] sm:$0xff]
    %v2079 = vld [vmem:[#allocation5 + $0xd8] sm:$0xff]
    %v2080 = vld [vmem:[#allocation5 + $0xe0] sm:$0xff]
    %v2081 = vld [vmem:[#allocation5 + $0xe8] sm:$0xff]
    %v2082 = vld [vmem:[#allocation5 + $0xf0] sm:$0xff]
    %v2083 = vld [vmem:[#allocation5 + $0xf8] sm:$0xff]
    %v2084 = vld [vmem:[%s4] sm:$0x3]
    %v2086 = vlaneseq
    %v2087 = vshrl.u32 %v2086, 7
    %v2088 = vsub.s32 0, %v2087
    %v2089 = vrot.slane %v2084, %v2088
    %v2090 = vlaneseq
    %v2091 = vshrl.u32 %v2090, 7
    %v2092 = vsub.s32 1, %v2091
    %v2093 = vrot.slane %v2084, %v2092
    %v2128 = vunpack.c.l.b16 %v2052
    %v2129 = vunpack.c.h.b16 %v2052
    %v2130 = vunpack.c.l.b16 %v2053
    %v2131 = vunpack.c.h.b16 %v2053
    %v2132 = vunpack.c.l.b16 %v2054
    %v2133 = vunpack.c.h.b16 %v2054
    %v2134 = vunpack.c.l.b16 %v2055
    %v2135 = vunpack.c.h.b16 %v2055
    %v2136 = vunpack.c.l.b16 %v2056
    %v2137 = vunpack.c.h.b16 %v2056
    %v2138 = vunpack.c.l.b16 %v2057
    %v2139 = vunpack.c.h.b16 %v2057
    %v2140 = vunpack.c.l.b16 %v2058
    %v2141 = vunpack.c.h.b16 %v2058
    %v2142 = vunpack.c.l.b16 %v2059
    %v2143 = vunpack.c.h.b16 %v2059
    %v2144 = vunpack.c.l.b16 %v2060
    %v2145 = vunpack.c.h.b16 %v2060
    %v2146 = vunpack.c.l.b16 %v2061
    %v2147 = vunpack.c.h.b16 %v2061
    %v2148 = vunpack.c.l.b16 %v2062
    %v2149 = vunpack.c.h.b16 %v2062
    %v2150 = vunpack.c.l.b16 %v2063
    %v2151 = vunpack.c.h.b16 %v2063
    %v2152 = vunpack.c.l.b16 %v2064
    %v2153 = vunpack.c.h.b16 %v2064
    %v2154 = vunpack.c.l.b16 %v2065
    %v2155 = vunpack.c.h.b16 %v2065
    %v2156 = vunpack.c.l.b16 %v2066
    %v2157 = vunpack.c.h.b16 %v2066
    %v2158 = vunpack.c.l.b16 %v2067
    %v2159 = vunpack.c.h.b16 %v2067
    %v2160 = vunpack.c.l.b16 %v2068
    %v2161 = vunpack.c.h.b16 %v2068
    %v2162 = vunpack.c.l.b16 %v2069
    %v2163 = vunpack.c.h.b16 %v2069
    %v2164 = vunpack.c.l.b16 %v2070
    %v2165 = vunpack.c.h.b16 %v2070
    %v2166 = vunpack.c.l.b16 %v2071
    %v2167 = vunpack.c.h.b16 %v2071
    %v2168 = vunpack.c.l.b16 %v2072
    %v2169 = vunpack.c.h.b16 %v2072
    %v2170 = vunpack.c.l.b16 %v2073
    %v2171 = vunpack.c.h.b16 %v2073
    %v2172 = vunpack.c.l.b16 %v2074
    %v2173 = vunpack.c.h.b16 %v2074
    %v2174 = vunpack.c.l.b16 %v2075
    %v2175 = vunpack.c.h.b16 %v2075
    %v2176 = vunpack.c.l.b16 %v2076
    %v2177 = vunpack.c.h.b16 %v2076
    %v2178 = vunpack.c.l.b16 %v2077
    %v2179 = vunpack.c.h.b16 %v2077
    %v2180 = vunpack.c.l.b16 %v2078
    %v2181 = vunpack.c.h.b16 %v2078
    %v2182 = vunpack.c.l.b16 %v2079
    %v2183 = vunpack.c.h.b16 %v2079
    %v2184 = vunpack.c.l.b16 %v2080
    %v2185 = vunpack.c.h.b16 %v2080
    %v2186 = vunpack.c.l.b16 %v2081
    %v2187 = vunpack.c.h.b16 %v2081
    %v2188 = vunpack.c.l.b16 %v2082
    %v2189 = vunpack.c.h.b16 %v2082
    %v2190 = vunpack.c.l.b16 %v2083
    %v2191 = vunpack.c.h.b16 %v2083
    %v2192 = vpack.c.b16 %v2130, %v2128
    %v2193 = vpack.c.b16 %v2131, %v2129
    %v2194 = vpack.c.b16 %v2134, %v2132
    %v2195 = vpack.c.b16 %v2135, %v2133
    %v2196 = vpack.c.b16 %v2138, %v2136
    %v2197 = vpack.c.b16 %v2139, %v2137
    %v2198 = vpack.c.b16 %v2142, %v2140
    %v2199 = vpack.c.b16 %v2143, %v2141
    %v2200 = vpack.c.b16 %v2146, %v2144
    %v2201 = vpack.c.b16 %v2147, %v2145
    %v2202 = vpack.c.b16 %v2150, %v2148
    %v2203 = vpack.c.b16 %v2151, %v2149
    %v2204 = vpack.c.b16 %v2154, %v2152
    %v2205 = vpack.c.b16 %v2155, %v2153
    %v2206 = vpack.c.b16 %v2158, %v2156
    %v2207 = vpack.c.b16 %v2159, %v2157
    %v2208 = vpack.c.b16 %v2162, %v2160
    %v2209 = vpack.c.b16 %v2163, %v2161
    %v2210 = vpack.c.b16 %v2166, %v2164
    %v2211 = vpack.c.b16 %v2167, %v2165
    %v2212 = vpack.c.b16 %v2170, %v2168
    %v2213 = vpack.c.b16 %v2171, %v2169
    %v2214 = vpack.c.b16 %v2174, %v2172
    %v2215 = vpack.c.b16 %v2175, %v2173
    %v2216 = vpack.c.b16 %v2178, %v2176
    %v2217 = vpack.c.b16 %v2179, %v2177
    %v2218 = vpack.c.b16 %v2182, %v2180
    %v2219 = vpack.c.b16 %v2183, %v2181
    %v2220 = vpack.c.b16 %v2186, %v2184
    %v2221 = vpack.c.b16 %v2187, %v2185
    %v2222 = vpack.c.b16 %v2190, %v2188
    %v2223 = vpack.c.b16 %v2191, %v2189
    %2256 = vmatprep.subr.bf16.mxu0 %v2193
    %2257 = vmatpush1.bf16.msra.mxu0 %v2192
    %2258 = vmatprep.subr.bf16.mxu0 %v2195
    %2259 = vmatpush1.bf16.msra.mxu0 %v2194
    %2260 = vmatprep.subr.bf16.mxu0 %v2197
    %2261 = vmatpush1.bf16.msra.mxu0 %v2196
    %2262 = vmatprep.subr.bf16.mxu0 %v2199
    %2263 = vmatpush1.bf16.msra.mxu0 %v2198
    %2264 = vmatprep.subr.bf16.mxu0 %v2201
    %2265 = vmatpush1.bf16.msra.mxu0 %v2200
    %2266 = vmatprep.subr.bf16.mxu0 %v2203
    %2267 = vmatpush1.bf16.msra.mxu0 %v2202
    %2268 = vmatprep.subr.bf16.mxu0 %v2205
    %2269 = vmatpush1.bf16.msra.mxu0 %v2204
    %2270 = vmatprep.subr.bf16.mxu0 %v2207
    %2271 = vmatpush1.bf16.msra.mxu0 %v2206
    %2272 = vmatprep.subr.bf16.mxu0 %v2209
    %2273 = vmatpush1.bf16.msra.mxu0 %v2208
    %2274 = vmatprep.subr.bf16.mxu0 %v2211
    %2275 = vmatpush1.bf16.msra.mxu0 %v2210
    %2276 = vmatprep.subr.bf16.mxu0 %v2213
    %2277 = vmatpush1.bf16.msra.mxu0 %v2212
    %2278 = vmatprep.subr.bf16.mxu0 %v2215
    %2279 = vmatpush1.bf16.msra.mxu0 %v2214
    %2280 = vmatprep.subr.bf16.mxu0 %v2217
    %2281 = vmatpush1.bf16.msra.mxu0 %v2216
    %2282 = vmatprep.subr.bf16.mxu0 %v2219
    %2283 = vmatpush1.bf16.msra.mxu0 %v2218
    %2284 = vmatprep.subr.bf16.mxu0 %v2221
    %2285 = vmatpush1.bf16.msra.mxu0 %v2220
    %2286 = vmatprep.subr.bf16.mxu0 %v2223
    %2287 = vmatpush1.bf16.msra.mxu0 %v2222
    %2288 = vmatprep.mubr.bf16.mxu0 %v2051
    %2289 = vmatmul.mubr.bf16.gmra.mrb[0].mxu0 %v2050
    %v2290 = vpop.f32.mrb[0].mxu0
    %v2291 = vadd.f32 %v2089, %v2290
    %v2292 = vpop.f32.mrb[0].mxu0
    %v2293 = vadd.f32 %v2093, %v2292
    %v2294 = vpop.f32.mrb[0].mxu0
    %v2295 = vpop.f32.mrb[0].mxu0
    %2296 = vdwg.mxu0
    %vm2297 = vcmp.gt.f32.partialorder %v2291, 0.0
    %vm2298 = vcmp.gt.f32.partialorder %v2293, 0.0
    %v2299 = vmul.f32 %v2291, 0.2
    %v2300 = vmul.f32 %v2293, 0.2
    %v2301 = vsel %vm2297, %v2291, %v2299
    %v2302 = vsel %vm2298, %v2293, %v2300
    %v2305 = vcombine.low %v2301, %v2302
    %v2307 = vunpack.c.l.s4 1983009808
    %v2308 = vunpack.c.0.s8 %v2307
    %v2309 = vlaneseq
    %v2310 = vshrl.u32 %v2309, 7
    %v2311 = vsub.s32 %v2308, %v2310
    %v2312 = vrot.slane %v2305, %v2311
    %2314 = vst [vmem:[%s6] sm:$0xf] %v2312
    %2315 = vst [vmem:[#allocation7] sm:$0xf] %v2036
    %v2318 = vcombine.low %v2006, %v2007
    %v2320 = vunpack.c.l.s4 1983009808
    %v2321 = vunpack.c.0.s8 %v2320
    %v2322 = vlaneseq
    %v2323 = vshrl.u32 %v2322, 7
    %v2324 = vsub.s32 %v2321, %v2323
    %v2325 = vrot.slane %v2318, %v2324
    %2327 = vst [vmem:[#allocation8] sm:$0xf] %v2325
    // Predicated region
    $region34: #{_forward_jit.1} parent=1 // pred_check
      _
    $region35: #{_forward_jit.1} parent=1 // pred_check_branch
      %2329 = sbr.rel (0) target = $region37
    $region36: #{_forward_jit.1} parent=1 // pred_region
      _
    $region37: #{_forward_jit.1} parent=1 // pred_fallthru
      _
    // Predicated region
    $region38: #{_forward_jit.1} parent=1 // pred_check
      _
    $region39: #{_forward_jit.1} parent=1 // pred_check_branch
      %2331 = sbr.rel (0) target = $region41
    $region40: #{_forward_jit.1} parent=1 // pred_region
      %s2333 = ssub.s32 64, 64
      %2334 = vsyncadd [#allocation4], %s2333
      %s2336 = sshll.u32 [#allocation7], 4
      %s2337 = int_to_ptr.vmem [resolvable:$true] %s2336
      %2339 = dma.vmem_to_hbm [thread:$0]  %s2337, 64, %s7, [#allocation4]
    $region41: #{_forward_jit.1} parent=1 // pred_fallthru
      _
    // Predicated region
    $region42: #{_forward_jit.1} parent=1 // pred_check
      _
    $region43: #{_forward_jit.1} parent=1 // pred_check_branch
      %2341 = sbr.rel (0) target = $region45
    $region44: #{_forward_jit.1} parent=1 // pred_region
      %s2343 = ssub.s32 64, 64
      %2344 = vsyncadd [#allocation9], %s2343
      %s2346 = sshll.u32 [#allocation8], 4
      %s2347 = int_to_ptr.vmem [resolvable:$true] %s2346
      %2349 = dma.vmem_to_hbm [thread:$0]  %s2347, 64, %s8, [#allocation9]
    $region45: #{_forward_jit.1} parent=1 // pred_fallthru
      _
    // Predicated region
    $region46: #{_forward_jit.1} parent=1 // pred_check
      _
    $region47: #{_forward_jit.1} parent=1 // pred_check_branch
      %2351 = sbr.rel (0) target = $region49
    $region48: #{_forward_jit.1} parent=1 // pred_region
      _
    $region49: #{_forward_jit.1} parent=1 // pred_fallthru
      _
    // Predicated region
    $region50: #{_forward_jit.1} parent=1 // pred_check
      _
    $region51: #{_forward_jit.1} parent=1 // pred_check_branch
      %2353 = sbr.rel (0) target = $region53
    $region52: #{_forward_jit.1} parent=1 // pred_region
      %2354 = dma.done [#allocation4], 64
    $region53: #{_forward_jit.1} parent=1 // pred_fallthru
      _
    // Predicated region
    $region54: #{_forward_jit.1} parent=1 // pred_check
      _
    $region55: #{_forward_jit.1} parent=1 // pred_check_branch
      %2356 = sbr.rel (0) target = $region57
    $region56: #{_forward_jit.1} parent=1 // pred_region
      %2357 = dma.done [#allocation9], 64
    $region57: #{_forward_jit.1} parent=1 // pred_fallthru
      _
    %2358 = vsyncpa [#allocation3], 1
    %2359 = vsyncpa [#allocation6], 1
    %2360 = vsyncpa [#allocation4], 1
    %2361 = vsyncpa [#allocation9], 1

</llo_original>
